<compile_context>
chip_gen: v6e
topology: v6e:2x2x1
jax: 0.10.0
libtpu: 0.0.40
codegen_flags: <defaults>
</compile_context>

<pallas_src>
import jax
import jax.numpy as jnp
from jax import lax
from jax.experimental import pallas as pl
from jax.experimental.pallas import tpu as pltpu


def _round_up(x: int, m: int) -> int:
    return ((x + m - 1) // m) * m


_ROW_CHUNK = 8                             # pass-2 sublane chunk (acc <= 16 vregs @ 2048)
_LANE_TILE_MAX = 2048
_TILE_BUDGET_BYTES = 16 * 1024 * 1024      # double-buffered streaming-input budget
_VMEM_LIMIT_BYTES = 48 * 1024 * 1024       # <= v7x-safe (64 MiB physical per TensorCore)


def _pick_lane_tile(hw: int, n: int) -> int:
    """Largest lane tile (multiple of 128) whose double-buffered pass-1 footprint fits
    the budget; clamped so the 'parallel' lane-tile grid has >= 2 steps when possible
    (both v7x TensorCores get work)."""
    hw128 = _round_up(hw, 128)
    # pass-1 input block is (6, N, 3, tile): the trailing 3 pads to 8 sublanes in VMEM.
    per_lane_p1 = 6 * n * 8 * 4 * 2                      # f32, double-buffered
    per_lane_p2 = 7 * _ROW_CHUNK * 4 * 2
    per_lane = max(per_lane_p1, per_lane_p2)
    t = (_TILE_BUDGET_BYTES // per_lane) // 128 * 128
    t = max(128, min(t, _LANE_TILE_MAX, hw128))
    if hw128 >= 2 * 128:
        t = min(t, _round_up(hw128 // 2, 128))           # guarantee >= 2 lane tiles
    return t


def _make_pass1_kernel(tile: int, hw: int, n_batch: int):
    lane_ragged = (hw % tile) != 0

    def kernel(imgs_ref, wf_ref, bf_ref, psum_ref):
        # imgs_ref: (6, N, 3, T) VMEM   wf_ref: (6, 3) SMEM   bf_ref: (6,) SMEM
        # psum_ref: (1, 6*N, 128) -- lane-dense per-tile partial sums, row f*N + n
        if lane_ragged:
            lane = (pl.program_id(0) * tile
                    + lax.broadcasted_iota(jnp.int32, (1, tile), 1))
            lane_ok = lane < hw
        for f in range(6):                               # 6 filter branches, unrolled
            # per-channel view reads: never materialize the (N, 3, T) slab in vregs
            x0 = imgs_ref[f, :, 0, :]                    # (N, T)
            x1 = imgs_ref[f, :, 1, :]
            x2 = imgs_ref[f, :, 2, :]
            filt = (wf_ref[f, 0] * x0 + wf_ref[f, 1] * x1
                    + wf_ref[f, 2] * x2 + bf_ref[f])     # 1x1 conv, (N, T)
            filt = jnp.maximum(filt, 0.1 * filt)         # exact LeakyReLU(0.1)
            if lane_ragged:
                filt = jnp.where(lane_ok, filt, 0.0)     # exclude clipped lanes
            s = jnp.sum(filt, axis=-1, keepdims=True)    # (N, 1) spatial partial sums
            psum_ref[0, f * n_batch:(f + 1) * n_batch, :] = jnp.broadcast_to(
                s, (n_batch, 128))

    return kernel


def _make_pass2_kernel(tile: int, hw: int, nr: int, rc: int):
    lane_ragged = (hw % tile) != 0
    row_ragged = (nr % rc) != 0

    def kernel(imgs_ref, zw_ref, out_ref, mnmx_ref):
        # imgs_ref: (6, rc, T)   zw_ref: (6, rc, 1)   out_ref: (rc, T)   mnmx_ref: (2,128)
        acc = zw_ref[0] * imgs_ref[0]
        for f in range(1, 6):                            # weighted sum over filter images
            acc = acc + zw_ref[f] * imgs_ref[f]
        out_ref[...] = acc                               # ragged rows/lanes clipped on store

        ok = None
        if lane_ragged:
            lane = (pl.program_id(1) * tile
                    + lax.broadcasted_iota(jnp.int32, (1, tile), 1))
            ok = lane < hw
        if row_ragged:
            row = (pl.program_id(0) * rc
                   + lax.broadcasted_iota(jnp.int32, (rc, 1), 0))
            r_ok = row < nr
            ok = r_ok if ok is None else (ok & r_ok)
        if ok is not None:
            tmin = jnp.min(jnp.where(ok, acc, jnp.inf))
            tmax = jnp.max(jnp.where(ok, acc, -jnp.inf))
        else:
            tmin = jnp.min(acc)
            tmax = jnp.max(acc)
        mnmx_ref[0:1, :] = jnp.full((1, 128), tmin, jnp.float32)
        mnmx_ref[1:2, :] = jnp.full((1, 128), tmax, jnp.float32)

    return kernel


def cse_forward(images, wf, bf, ws, we):
    """cSE forward. images: (6, N, 3, H, W) f32 -> (N, 3, H, W) f32."""
    F, N, C, H, W = images.shape
    assert F == 6 and C == 3
    hw = H * W
    nr = N * C

    x = images.astype(jnp.float32)
    imgs4 = x.reshape(F, N, C, hw)        # pass-1 view (free reshape, no pad / no copy)
    imgs3 = x.reshape(F, nr, hw)          # pass-2 view: rows ordered (n, c), lane = HW

    tile = _pick_lane_tile(hw, N)
    num_tiles = pl.cdiv(hw, tile)
    rc = _ROW_CHUNK
    num_rc = pl.cdiv(nr, rc)

    wf2 = wf.reshape(6, 3).astype(jnp.float32)
    bf1 = bf.reshape(6).astype(jnp.float32)

    cparams1 = pltpu.CompilerParams(
        dimension_semantics=("parallel",),
        vmem_limit_bytes=_VMEM_LIMIT_BYTES)
    cparams2 = pltpu.CompilerParams(
        dimension_semantics=("parallel", "parallel"),
        vmem_limit_bytes=_VMEM_LIMIT_BYTES)

    # ---- pass 1: per-filter 1x1 conv + LeakyReLU + per-tile spatial partial sums ----
    psum = pl.pallas_call(
        _make_pass1_kernel(tile, hw, N),
        out_shape=jax.ShapeDtypeStruct((num_tiles, 6 * N, 128), jnp.float32),
        grid=(num_tiles,),
        in_specs=[
            pl.BlockSpec((6, N, 3, tile), lambda t: (0, 0, 0, t)),
            pl.BlockSpec(memory_space=pltpu.MemorySpace.SMEM),
            pl.BlockSpec(memory_space=pltpu.MemorySpace.SMEM),
        ],
        out_specs=pl.BlockSpec((1, 6 * N, 128), lambda t: (t, 0, 0)),
        compiler_params=cparams1,
    )(imgs4, wf2, bf1)

    # ---- tiny squeeze / excitation / softmax (O(6N) scalars, wrapper-side, off MXU) ----
    z0 = psum.sum(axis=0)[:, 0].reshape(6, N) / float(hw)   # AdaptiveAvgPool2d(1)
    z1 = ws.reshape(3, 6).astype(jnp.float32) @ z0          # Conv_Squeeze
    z2 = we.reshape(6, 3).astype(jnp.float32) @ z1          # Conv_Excitation
    z = jax.nn.softmax(z2, axis=0)                          # (6, N) softmax over channels
    zw = jnp.repeat(z, 3, axis=1).reshape(6, nr, 1)         # per-(n, c) row weights

    # ---- pass 2: weighted sum of the 6 filter images + per-block min/max ----
    out_raw, mnmx = pl.pallas_call(
        _make_pass2_kernel(tile, hw, nr, rc),
        out_shape=(
            jax.ShapeDtypeStruct((nr, hw), jnp.float32),
            jax.ShapeDtypeStruct((2, num_rc * num_tiles * 128), jnp.float32),
        ),
        grid=(num_rc, num_tiles),
        in_specs=[
            pl.BlockSpec((6, rc, tile), lambda r, t: (0, r, t)),
            pl.BlockSpec((6, rc, 1), lambda r, t: (0, r, 0)),
        ],
        out_specs=(
            pl.BlockSpec((rc, tile), lambda r, t: (r, t)),
            pl.BlockSpec((2, 128), lambda r, t: (0, r * num_tiles + t)),
        ),
        compiler_params=cparams2,
    )(imgs3, zw)

    # ---- global min-max normalization (fused elementwise, reciprocal-multiply).
    #      NOTE: like the PyTorch reference, NaN/Inf if max == min.
    mn = jnp.min(mnmx[0])
    mx = jnp.max(mnmx[1])
    out = (out_raw - mn) * (1.0 / (mx - mn))
    return out.reshape(N, C, H, W)


def cse_reference(images, wf, bf, ws, we):
    """Pure-JAX reference of the cSE forward for correctness checking."""
    x = images.astype(jnp.float32)
    filt = jnp.einsum('fnchw,fc->fnhw', x, wf) + bf[:, None, None, None]
    filt = jnp.where(filt > 0, filt, 0.1 * filt)
    z0 = jnp.mean(filt, axis=(2, 3))                 # (6, N)
    z = jax.nn.softmax(we @ (ws @ z0), axis=0)       # (6, N)
    out = jnp.einsum('fn,fnchw->nchw', z, x)
    return (out - out.min()) / (out.max() - out.min())


def init_params(key):
    """Deterministic synthetic init mirroring the module's parameter shapes.

    Filter convs: 6 x Conv2d(3,1,1,bias=True)  -> wf (6,3), bf (6,)
    Conv_Squeeze: Conv2d(6,3,1,bias=False)     -> ws (3,6)
    Conv_Excitation: Conv2d(3,6,1,bias=False)  -> we (6,3)
    Kaiming-normal-ish (a=0.1, fan_out, leaky_relu) scaling.
    """
    kwf, kbf, kws, kwe = jax.random.split(key, 4)
    a = 0.1
    gain = (2.0 / (1.0 + a * a)) ** 0.5
    wf = jax.random.normal(kwf, (6, 3), jnp.float32) * (gain / 1.0)
    bf = jax.random.uniform(kbf, (6,), jnp.float32, -0.5, 0.5)
    ws = jax.random.normal(kws, (3, 6), jnp.float32) * (gain / 3.0 ** 0.5)
    we = jax.random.normal(kwe, (6, 3), jnp.float32) * (gain / 6.0 ** 0.5)
    return wf, bf, ws, we


if __name__ == "__main__":
    key = jax.random.PRNGKey(0)
    kimg, kparam, kimg2 = jax.random.split(key, 3)
    wf, bf, ws, we = init_params(kparam)
    forward = jax.jit(cse_forward)

    # config A: batch=2, 16x16 — 128-aligned HW, >=2 lane tiles, ragged row chunk (nr=6<8)
    N, C, H, W = 2, 3, 16, 16
    images = jax.random.normal(kimg, (6, N, C, H, W), jnp.float32)
    out = jax.block_until_ready(forward(images, wf, bf, ws, we))
    assert out.shape == (N, C, H, W)
    assert bool(jnp.isfinite(out).all())
    assert float(jnp.min(out)) >= -1e-5 and float(jnp.max(out)) <= 1.0 + 1e-5
    ref = cse_reference(images, wf, bf, ws, we)
    err = float(jnp.max(jnp.abs(out - ref)))
    assert bool(jnp.allclose(out, ref, atol=1e-3, rtol=1e-3)), err

    # config B: batch=1, 13x13 — H*W not a multiple of 128, exercises lane masking
    N2, H2, W2 = 1, 13, 13
    images2 = jax.random.normal(kimg2, (6, N2, C, H2, W2), jnp.float32)
    out2 = jax.block_until_ready(forward(images2, wf, bf, ws, we))
    ref2 = cse_reference(images2, wf, bf, ws, we)
    assert out2.shape == (N2, C, H2, W2)
    err2 = float(jnp.max(jnp.abs(out2 - ref2)))
    assert bool(jnp.allclose(out2, ref2, atol=1e-3, rtol=1e-3)), err2

    print("KERNEL_OK")
</pallas_src>

<mosaic_0001>
module attributes {stable_mosaic.version = 11 : i64} {
  func.func @kernel(%arg0: i32, %arg1: memref<6x2x3x128xf32, #tpu.memory_space<vmem>>, %arg2: memref<6x3xf32, #tpu.memory_space<smem>>, %arg3: memref<6xf32, #tpu.memory_space<smem>>, %arg4: memref<1x12x128xf32, #tpu.memory_space<vmem>>) attributes {dimension_semantics = [#tpu.dimension_semantics<parallel>], iteration_bounds = array<i64: 2>, scalar_prefetch = 0 : i64, scratch_operands = 0 : i64, tpu.core_type = #tpu.core_type<tc>, window_params = [{transform_indices = @transform_0, window_bounds = array<i64: 6, 2, 3, 128>}, {transform_indices = @transform_1, window_bounds = array<i64: 6, 3>}, {transform_indices = @transform_2, window_bounds = array<i64: 6>}, {transform_indices = @transform_3, window_bounds = array<i64: 1, 12, 128>}]} {
    %c0 = arith.constant 0 : index
    %c0_0 = arith.constant 0 : index
    %c0_1 = arith.constant 0 : index
    %c0_2 = arith.constant 0 : index
    %0 = vector.load %arg1[%c0, %c0_0, %c0_1, %c0_2] : memref<6x2x3x128xf32, #tpu.memory_space<vmem>>, vector<1x2x1x128xf32>
    %1 = vector.shape_cast %0 : vector<1x2x1x128xf32> to vector<2x128xf32>
    %c0_3 = arith.constant 0 : index
    %c0_4 = arith.constant 0 : index
    %c1 = arith.constant 1 : index
    %c0_5 = arith.constant 0 : index
    %2 = vector.load %arg1[%c0_3, %c0_4, %c1, %c0_5] : memref<6x2x3x128xf32, #tpu.memory_space<vmem>>, vector<1x2x1x128xf32>
    %3 = vector.shape_cast %2 : vector<1x2x1x128xf32> to vector<2x128xf32>
    %c0_6 = arith.constant 0 : index
    %c0_7 = arith.constant 0 : index
    %c2 = arith.constant 2 : index
    %c0_8 = arith.constant 0 : index
    %4 = vector.load %arg1[%c0_6, %c0_7, %c2, %c0_8] : memref<6x2x3x128xf32, #tpu.memory_space<vmem>>, vector<1x2x1x128xf32>
    %5 = vector.shape_cast %4 : vector<1x2x1x128xf32> to vector<2x128xf32>
    %c0_9 = arith.constant 0 : index
    %c0_10 = arith.constant 0 : index
    %6 = memref.load %arg2[%c0_9, %c0_10] : memref<6x3xf32, #tpu.memory_space<smem>>
    %7 = vector.broadcast %6 : f32 to vector<2x128xf32>
    %8 = arith.mulf %7, %1 : vector<2x128xf32>
    %c0_11 = arith.constant 0 : index
    %c1_12 = arith.constant 1 : index
    %9 = memref.load %arg2[%c0_11, %c1_12] : memref<6x3xf32, #tpu.memory_space<smem>>
    %10 = vector.broadcast %9 : f32 to vector<2x128xf32>
    %11 = arith.mulf %10, %3 : vector<2x128xf32>
    %12 = arith.addf %8, %11 : vector<2x128xf32>
    %c0_13 = arith.constant 0 : index
    %c2_14 = arith.constant 2 : index
    %13 = memref.load %arg2[%c0_13, %c2_14] : memref<6x3xf32, #tpu.memory_space<smem>>
    %14 = vector.broadcast %13 : f32 to vector<2x128xf32>
    %15 = arith.mulf %14, %5 : vector<2x128xf32>
    %16 = arith.addf %12, %15 : vector<2x128xf32>
    %c0_15 = arith.constant 0 : index
    %17 = memref.load %arg3[%c0_15] : memref<6xf32, #tpu.memory_space<smem>>
    %18 = vector.broadcast %17 : f32 to vector<2x128xf32>
    %19 = arith.addf %16, %18 : vector<2x128xf32>
    %cst = arith.constant 1.000000e-01 : f32
    %20 = vector.broadcast %cst : f32 to vector<2x128xf32>
    %21 = arith.mulf %20, %19 : vector<2x128xf32>
    %22 = arith.maximumf %19, %21 : vector<2x128xf32>
    %cst_16 = arith.constant dense<0.000000e+00> : vector<2xf32>
    %23 = vector.multi_reduction <add>, %22, %cst_16 [1] : vector<2x128xf32> to vector<2xf32>
    %24 = vector.shape_cast %23 : vector<2xf32> to vector<2x1xf32>
    %25 = vector.shape_cast %24 : vector<2x1xf32> to vector<2x1xf32>
    %26 = vector.broadcast %25 : vector<2x1xf32> to vector<2x128xf32>
    %c0_17 = arith.constant 0 : index
    %c0_18 = arith.constant 0 : index
    %c0_19 = arith.constant 0 : index
    %27 = vector.load %arg4[%c0_17, %c0_18, %c0_19] : memref<1x12x128xf32, #tpu.memory_space<vmem>>, vector<1x2x128xf32>
    %28 = vector.shape_cast %27 : vector<1x2x128xf32> to vector<2x128xf32>
    %29 = vector.shape_cast %26 : vector<2x128xf32> to vector<1x2x128xf32>
    tpu.vector_store %arg4[%c0_17, %c0_18, %c0_19], %29 {strides = array<i32>} : memref<1x12x128xf32, #tpu.memory_space<vmem>>, vector<1x2x128xf32>,
    %c1_20 = arith.constant 1 : index
    %c0_21 = arith.constant 0 : index
    %c0_22 = arith.constant 0 : index
    %c0_23 = arith.constant 0 : index
    %30 = vector.load %arg1[%c1_20, %c0_21, %c0_22, %c0_23] : memref<6x2x3x128xf32, #tpu.memory_space<vmem>>, vector<1x2x1x128xf32>
    %31 = vector.shape_cast %30 : vector<1x2x1x128xf32> to vector<2x128xf32>
    %c1_24 = arith.constant 1 : index
    %c0_25 = arith.constant 0 : index
    %c1_26 = arith.constant 1 : index
    %c0_27 = arith.constant 0 : index
    %32 = vector.load %arg1[%c1_24, %c0_25, %c1_26, %c0_27] : memref<6x2x3x128xf32, #tpu.memory_space<vmem>>, vector<1x2x1x128xf32>
    %33 = vector.shape_cast %32 : vector<1x2x1x128xf32> to vector<2x128xf32>
    %c1_28 = arith.constant 1 : index
    %c0_29 = arith.constant 0 : index
    %c2_30 = arith.constant 2 : index
    %c0_31 = arith.constant 0 : index
    %34 = vector.load %arg1[%c1_28, %c0_29, %c2_30, %c0_31] : memref<6x2x3x128xf32, #tpu.memory_space<vmem>>, vector<1x2x1x128xf32>
    %35 = vector.shape_cast %34 : vector<1x2x1x128xf32> to vector<2x128xf32>
    %c1_32 = arith.constant 1 : index
    %c0_33 = arith.constant 0 : index
    %36 = memref.load %arg2[%c1_32, %c0_33] : memref<6x3xf32, #tpu.memory_space<smem>>
    %37 = vector.broadcast %36 : f32 to vector<2x128xf32>
    %38 = arith.mulf %37, %31 : vector<2x128xf32>
    %c1_34 = arith.constant 1 : index
    %c1_35 = arith.constant 1 : index
    %39 = memref.load %arg2[%c1_34, %c1_35] : memref<6x3xf32, #tpu.memory_space<smem>>
    %40 = vector.broadcast %39 : f32 to vector<2x128xf32>
    %41 = arith.mulf %40, %33 : vector<2x128xf32>
    %42 = arith.addf %38, %41 : vector<2x128xf32>
    %c1_36 = arith.constant 1 : index
    %c2_37 = arith.constant 2 : index
    %43 = memref.load %arg2[%c1_36, %c2_37] : memref<6x3xf32, #tpu.memory_space<smem>>
    %44 = vector.broadcast %43 : f32 to vector<2x128xf32>
    %45 = arith.mulf %44, %35 : vector<2x128xf32>
    %46 = arith.addf %42, %45 : vector<2x128xf32>
    %c1_38 = arith.constant 1 : index
    %47 = memref.load %arg3[%c1_38] : memref<6xf32, #tpu.memory_space<smem>>
    %48 = vector.broadcast %47 : f32 to vector<2x128xf32>
    %49 = arith.addf %46, %48 : vector<2x128xf32>
    %cst_39 = arith.constant 1.000000e-01 : f32
    %50 = vector.broadcast %cst_39 : f32 to vector<2x128xf32>
    %51 = arith.mulf %50, %49 : vector<2x128xf32>
    %52 = arith.maximumf %49, %51 : vector<2x128xf32>
    %cst_40 = arith.constant dense<0.000000e+00> : vector<2xf32>
    %53 = vector.multi_reduction <add>, %52, %cst_40 [1] : vector<2x128xf32> to vector<2xf32>
    %54 = vector.shape_cast %53 : vector<2xf32> to vector<2x1xf32>
    %55 = vector.shape_cast %54 : vector<2x1xf32> to vector<2x1xf32>
    %56 = vector.broadcast %55 : vector<2x1xf32> to vector<2x128xf32>
    %c0_41 = arith.constant 0 : index
    %c2_42 = arith.constant 2 : index
    %c0_43 = arith.constant 0 : index
    %57 = vector.load %arg4[%c0_41, %c2_42, %c0_43] : memref<1x12x128xf32, #tpu.memory_space<vmem>>, vector<1x2x128xf32>
    %58 = vector.shape_cast %57 : vector<1x2x128xf32> to vector<2x128xf32>
    %59 = vector.shape_cast %56 : vector<2x128xf32> to vector<1x2x128xf32>
    tpu.vector_store %arg4[%c0_41, %c2_42, %c0_43], %59 {strides = array<i32>} : memref<1x12x128xf32, #tpu.memory_space<vmem>>, vector<1x2x128xf32>,
    %c2_44 = arith.constant 2 : index
    %c0_45 = arith.constant 0 : index
    %c0_46 = arith.constant 0 : index
    %c0_47 = arith.constant 0 : index
    %60 = vector.load %arg1[%c2_44, %c0_45, %c0_46, %c0_47] : memref<6x2x3x128xf32, #tpu.memory_space<vmem>>, vector<1x2x1x128xf32>
    %61 = vector.shape_cast %60 : vector<1x2x1x128xf32> to vector<2x128xf32>
    %c2_48 = arith.constant 2 : index
    %c0_49 = arith.constant 0 : index
    %c1_50 = arith.constant 1 : index
    %c0_51 = arith.constant 0 : index
    %62 = vector.load %arg1[%c2_48, %c0_49, %c1_50, %c0_51] : memref<6x2x3x128xf32, #tpu.memory_space<vmem>>, vector<1x2x1x128xf32>
    %63 = vector.shape_cast %62 : vector<1x2x1x128xf32> to vector<2x128xf32>
    %c2_52 = arith.constant 2 : index
    %c0_53 = arith.constant 0 : index
    %c2_54 = arith.constant 2 : index
    %c0_55 = arith.constant 0 : index
    %64 = vector.load %arg1[%c2_52, %c0_53, %c2_54, %c0_55] : memref<6x2x3x128xf32, #tpu.memory_space<vmem>>, vector<1x2x1x128xf32>
    %65 = vector.shape_cast %64 : vector<1x2x1x128xf32> to vector<2x128xf32>
    %c2_56 = arith.constant 2 : index
    %c0_57 = arith.constant 0 : index
    %66 = memref.load %arg2[%c2_56, %c0_57] : memref<6x3xf32, #tpu.memory_space<smem>>
    %67 = vector.broadcast %66 : f32 to vector<2x128xf32>
    %68 = arith.mulf %67, %61 : vector<2x128xf32>
    %c2_58 = arith.constant 2 : index
    %c1_59 = arith.constant 1 : index
    %69 = memref.load %arg2[%c2_58, %c1_59] : memref<6x3xf32, #tpu.memory_space<smem>>
    %70 = vector.broadcast %69 : f32 to vector<2x128xf32>
    %71 = arith.mulf %70, %63 : vector<2x128xf32>
    %72 = arith.addf %68, %71 : vector<2x128xf32>
    %c2_60 = arith.constant 2 : index
    %c2_61 = arith.constant 2 : index
    %73 = memref.load %arg2[%c2_60, %c2_61] : memref<6x3xf32, #tpu.memory_space<smem>>
    %74 = vector.broadcast %73 : f32 to vector<2x128xf32>
    %75 = arith.mulf %74, %65 : vector<2x128xf32>
    %76 = arith.addf %72, %75 : vector<2x128xf32>
    %c2_62 = arith.constant 2 : index
    %77 = memref.load %arg3[%c2_62] : memref<6xf32, #tpu.memory_space<smem>>
    %78 = vector.broadcast %77 : f32 to vector<2x128xf32>
    %79 = arith.addf %76, %78 : vector<2x128xf32>
    %cst_63 = arith.constant 1.000000e-01 : f32
    %80 = vector.broadcast %cst_63 : f32 to vector<2x128xf32>
    %81 = arith.mulf %80, %79 : vector<2x128xf32>
    %82 = arith.maximumf %79, %81 : vector<2x128xf32>
    %cst_64 = arith.constant dense<0.000000e+00> : vector<2xf32>
    %83 = vector.multi_reduction <add>, %82, %cst_64 [1] : vector<2x128xf32> to vector<2xf32>
    %84 = vector.shape_cast %83 : vector<2xf32> to vector<2x1xf32>
    %85 = vector.shape_cast %84 : vector<2x1xf32> to vector<2x1xf32>
    %86 = vector.broadcast %85 : vector<2x1xf32> to vector<2x128xf32>
    %c0_65 = arith.constant 0 : index
    %c4 = arith.constant 4 : index
    %c0_66 = arith.constant 0 : index
    %87 = vector.load %arg4[%c0_65, %c4, %c0_66] : memref<1x12x128xf32, #tpu.memory_space<vmem>>, vector<1x2x128xf32>
    %88 = vector.shape_cast %87 : vector<1x2x128xf32> to vector<2x128xf32>
    %89 = vector.shape_cast %86 : vector<2x128xf32> to vector<1x2x128xf32>
    tpu.vector_store %arg4[%c0_65, %c4, %c0_66], %89 {strides = array<i32>} : memref<1x12x128xf32, #tpu.memory_space<vmem>>, vector<1x2x128xf32>,
    %c3 = arith.constant 3 : index
    %c0_67 = arith.constant 0 : index
    %c0_68 = arith.constant 0 : index
    %c0_69 = arith.constant 0 : index
    %90 = vector.load %arg1[%c3, %c0_67, %c0_68, %c0_69] : memref<6x2x3x128xf32, #tpu.memory_space<vmem>>, vector<1x2x1x128xf32>
    %91 = vector.shape_cast %90 : vector<1x2x1x128xf32> to vector<2x128xf32>
    %c3_70 = arith.constant 3 : index
    %c0_71 = arith.constant 0 : index
    %c1_72 = arith.constant 1 : index
    %c0_73 = arith.constant 0 : index
    %92 = vector.load %arg1[%c3_70, %c0_71, %c1_72, %c0_73] : memref<6x2x3x128xf32, #tpu.memory_space<vmem>>, vector<1x2x1x128xf32>
    %93 = vector.shape_cast %92 : vector<1x2x1x128xf32> to vector<2x128xf32>
    %c3_74 = arith.constant 3 : index
    %c0_75 = arith.constant 0 : index
    %c2_76 = arith.constant 2 : index
    %c0_77 = arith.constant 0 : index
    %94 = vector.load %arg1[%c3_74, %c0_75, %c2_76, %c0_77] : memref<6x2x3x128xf32, #tpu.memory_space<vmem>>, vector<1x2x1x128xf32>
    %95 = vector.shape_cast %94 : vector<1x2x1x128xf32> to vector<2x128xf32>
    %c3_78 = arith.constant 3 : index
    %c0_79 = arith.constant 0 : index
    %96 = memref.load %arg2[%c3_78, %c0_79] : memref<6x3xf32, #tpu.memory_space<smem>>
    %97 = vector.broadcast %96 : f32 to vector<2x128xf32>
    %98 = arith.mulf %97, %91 : vector<2x128xf32>
    %c3_80 = arith.constant 3 : index
    %c1_81 = arith.constant 1 : index
    %99 = memref.load %arg2[%c3_80, %c1_81] : memref<6x3xf32, #tpu.memory_space<smem>>
    %100 = vector.broadcast %99 : f32 to vector<2x128xf32>
    %101 = arith.mulf %100, %93 : vector<2x128xf32>
    %102 = arith.addf %98, %101 : vector<2x128xf32>
    %c3_82 = arith.constant 3 : index
    %c2_83 = arith.constant 2 : index
    %103 = memref.load %arg2[%c3_82, %c2_83] : memref<6x3xf32, #tpu.memory_space<smem>>
    %104 = vector.broadcast %103 : f32 to vector<2x128xf32>
    %105 = arith.mulf %104, %95 : vector<2x128xf32>
    %106 = arith.addf %102, %105 : vector<2x128xf32>
    %c3_84 = arith.constant 3 : index
    %107 = memref.load %arg3[%c3_84] : memref<6xf32, #tpu.memory_space<smem>>
    %108 = vector.broadcast %107 : f32 to vector<2x128xf32>
    %109 = arith.addf %106, %108 : vector<2x128xf32>
    %cst_85 = arith.constant 1.000000e-01 : f32
    %110 = vector.broadcast %cst_85 : f32 to vector<2x128xf32>
    %111 = arith.mulf %110, %109 : vector<2x128xf32>
    %112 = arith.maximumf %109, %111 : vector<2x128xf32>
    %cst_86 = arith.constant dense<0.000000e+00> : vector<2xf32>
    %113 = vector.multi_reduction <add>, %112, %cst_86 [1] : vector<2x128xf32> to vector<2xf32>
    %114 = vector.shape_cast %113 : vector<2xf32> to vector<2x1xf32>
    %115 = vector.shape_cast %114 : vector<2x1xf32> to vector<2x1xf32>
    %116 = vector.broadcast %115 : vector<2x1xf32> to vector<2x128xf32>
    %c0_87 = arith.constant 0 : index
    %c6 = arith.constant 6 : index
    %c0_88 = arith.constant 0 : index
    %117 = vector.load %arg4[%c0_87, %c6, %c0_88] : memref<1x12x128xf32, #tpu.memory_space<vmem>>, vector<1x2x128xf32>
    %118 = vector.shape_cast %117 : vector<1x2x128xf32> to vector<2x128xf32>
    %119 = vector.shape_cast %116 : vector<2x128xf32> to vector<1x2x128xf32>
    tpu.vector_store %arg4[%c0_87, %c6, %c0_88], %119 {strides = array<i32>} : memref<1x12x128xf32, #tpu.memory_space<vmem>>, vector<1x2x128xf32>,
    %c4_89 = arith.constant 4 : index
    %c0_90 = arith.constant 0 : index
    %c0_91 = arith.constant 0 : index
    %c0_92 = arith.constant 0 : index
    %120 = vector.load %arg1[%c4_89, %c0_90, %c0_91, %c0_92] : memref<6x2x3x128xf32, #tpu.memory_space<vmem>>, vector<1x2x1x128xf32>
    %121 = vector.shape_cast %120 : vector<1x2x1x128xf32> to vector<2x128xf32>
    %c4_93 = arith.constant 4 : index
    %c0_94 = arith.constant 0 : index
    %c1_95 = arith.constant 1 : index
    %c0_96 = arith.constant 0 : index
    %122 = vector.load %arg1[%c4_93, %c0_94, %c1_95, %c0_96] : memref<6x2x3x128xf32, #tpu.memory_space<vmem>>, vector<1x2x1x128xf32>
    %123 = vector.shape_cast %122 : vector<1x2x1x128xf32> to vector<2x128xf32>
    %c4_97 = arith.constant 4 : index
    %c0_98 = arith.constant 0 : index
    %c2_99 = arith.constant 2 : index
    %c0_100 = arith.constant 0 : index
    %124 = vector.load %arg1[%c4_97, %c0_98, %c2_99, %c0_100] : memref<6x2x3x128xf32, #tpu.memory_space<vmem>>, vector<1x2x1x128xf32>
    %125 = vector.shape_cast %124 : vector<1x2x1x128xf32> to vector<2x128xf32>
    %c4_101 = arith.constant 4 : index
    %c0_102 = arith.constant 0 : index
    %126 = memref.load %arg2[%c4_101, %c0_102] : memref<6x3xf32, #tpu.memory_space<smem>>
    %127 = vector.broadcast %126 : f32 to vector<2x128xf32>
    %128 = arith.mulf %127, %121 : vector<2x128xf32>
    %c4_103 = arith.constant 4 : index
    %c1_104 = arith.constant 1 : index
    %129 = memref.load %arg2[%c4_103, %c1_104] : memref<6x3xf32, #tpu.memory_space<smem>>
    %130 = vector.broadcast %129 : f32 to vector<2x128xf32>
    %131 = arith.mulf %130, %123 : vector<2x128xf32>
    %132 = arith.addf %128, %131 : vector<2x128xf32>
    %c4_105 = arith.constant 4 : index
    %c2_106 = arith.constant 2 : index
    %133 = memref.load %arg2[%c4_105, %c2_106] : memref<6x3xf32, #tpu.memory_space<smem>>
    %134 = vector.broadcast %133 : f32 to vector<2x128xf32>
    %135 = arith.mulf %134, %125 : vector<2x128xf32>
    %136 = arith.addf %132, %135 : vector<2x128xf32>
    %c4_107 = arith.constant 4 : index
    %137 = memref.load %arg3[%c4_107] : memref<6xf32, #tpu.memory_space<smem>>
    %138 = vector.broadcast %137 : f32 to vector<2x128xf32>
    %139 = arith.addf %136, %138 : vector<2x128xf32>
    %cst_108 = arith.constant 1.000000e-01 : f32
    %140 = vector.broadcast %cst_108 : f32 to vector<2x128xf32>
    %141 = arith.mulf %140, %139 : vector<2x128xf32>
    %142 = arith.maximumf %139, %141 : vector<2x128xf32>
    %cst_109 = arith.constant dense<0.000000e+00> : vector<2xf32>
    %143 = vector.multi_reduction <add>, %142, %cst_109 [1] : vector<2x128xf32> to vector<2xf32>
    %144 = vector.shape_cast %143 : vector<2xf32> to vector<2x1xf32>
    %145 = vector.shape_cast %144 : vector<2x1xf32> to vector<2x1xf32>
    %146 = vector.broadcast %145 : vector<2x1xf32> to vector<2x128xf32>
    %c0_110 = arith.constant 0 : index
    %c8 = arith.constant 8 : index
    %c0_111 = arith.constant 0 : index
    %147 = vector.load %arg4[%c0_110, %c8, %c0_111] : memref<1x12x128xf32, #tpu.memory_space<vmem>>, vector<1x2x128xf32>
    %148 = vector.shape_cast %147 : vector<1x2x128xf32> to vector<2x128xf32>
    %149 = vector.shape_cast %146 : vector<2x128xf32> to vector<1x2x128xf32>
    tpu.vector_store %arg4[%c0_110, %c8, %c0_111], %149 {strides = array<i32>} : memref<1x12x128xf32, #tpu.memory_space<vmem>>, vector<1x2x128xf32>,
    %c5 = arith.constant 5 : index
    %c0_112 = arith.constant 0 : index
    %c0_113 = arith.constant 0 : index
    %c0_114 = arith.constant 0 : index
    %150 = vector.load %arg1[%c5, %c0_112, %c0_113, %c0_114] : memref<6x2x3x128xf32, #tpu.memory_space<vmem>>, vector<1x2x1x128xf32>
    %151 = vector.shape_cast %150 : vector<1x2x1x128xf32> to vector<2x128xf32>
    %c5_115 = arith.constant 5 : index
    %c0_116 = arith.constant 0 : index
    %c1_117 = arith.constant 1 : index
    %c0_118 = arith.constant 0 : index
    %152 = vector.load %arg1[%c5_115, %c0_116, %c1_117, %c0_118] : memref<6x2x3x128xf32, #tpu.memory_space<vmem>>, vector<1x2x1x128xf32>
    %153 = vector.shape_cast %152 : vector<1x2x1x128xf32> to vector<2x128xf32>
    %c5_119 = arith.constant 5 : index
    %c0_120 = arith.constant 0 : index
    %c2_121 = arith.constant 2 : index
    %c0_122 = arith.constant 0 : index
    %154 = vector.load %arg1[%c5_119, %c0_120, %c2_121, %c0_122] : memref<6x2x3x128xf32, #tpu.memory_space<vmem>>, vector<1x2x1x128xf32>
    %155 = vector.shape_cast %154 : vector<1x2x1x128xf32> to vector<2x128xf32>
    %c5_123 = arith.constant 5 : index
    %c0_124 = arith.constant 0 : index
    %156 = memref.load %arg2[%c5_123, %c0_124] : memref<6x3xf32, #tpu.memory_space<smem>>
    %157 = vector.broadcast %156 : f32 to vector<2x128xf32>
    %158 = arith.mulf %157, %151 : vector<2x128xf32>
    %c5_125 = arith.constant 5 : index
    %c1_126 = arith.constant 1 : index
    %159 = memref.load %arg2[%c5_125, %c1_126] : memref<6x3xf32, #tpu.memory_space<smem>>
    %160 = vector.broadcast %159 : f32 to vector<2x128xf32>
    %161 = arith.mulf %160, %153 : vector<2x128xf32>
    %162 = arith.addf %158, %161 : vector<2x128xf32>
    %c5_127 = arith.constant 5 : index
    %c2_128 = arith.constant 2 : index
    %163 = memref.load %arg2[%c5_127, %c2_128] : memref<6x3xf32, #tpu.memory_space<smem>>
    %164 = vector.broadcast %163 : f32 to vector<2x128xf32>
    %165 = arith.mulf %164, %155 : vector<2x128xf32>
    %166 = arith.addf %162, %165 : vector<2x128xf32>
    %c5_129 = arith.constant 5 : index
    %167 = memref.load %arg3[%c5_129] : memref<6xf32, #tpu.memory_space<smem>>
    %168 = vector.broadcast %167 : f32 to vector<2x128xf32>
    %169 = arith.addf %166, %168 : vector<2x128xf32>
    %cst_130 = arith.constant 1.000000e-01 : f32
    %170 = vector.broadcast %cst_130 : f32 to vector<2x128xf32>
    %171 = arith.mulf %170, %169 : vector<2x128xf32>
    %172 = arith.maximumf %169, %171 : vector<2x128xf32>
    %cst_131 = arith.constant dense<0.000000e+00> : vector<2xf32>
    %173 = vector.multi_reduction <add>, %172, %cst_131 [1] : vector<2x128xf32> to vector<2xf32>
    %174 = vector.shape_cast %173 : vector<2xf32> to vector<2x1xf32>
    %175 = vector.shape_cast %174 : vector<2x1xf32> to vector<2x1xf32>
    %176 = vector.broadcast %175 : vector<2x1xf32> to vector<2x128xf32>
    %c0_132 = arith.constant 0 : index
    %c10 = arith.constant 10 : index
    %c0_133 = arith.constant 0 : index
    %177 = vector.load %arg4[%c0_132, %c10, %c0_133] : memref<1x12x128xf32, #tpu.memory_space<vmem>>, vector<1x2x128xf32>
    %178 = vector.shape_cast %177 : vector<1x2x128xf32> to vector<2x128xf32>
    %179 = vector.shape_cast %176 : vector<2x128xf32> to vector<1x2x128xf32>
    tpu.vector_store %arg4[%c0_132, %c10, %c0_133], %179 {strides = array<i32>} : memref<1x12x128xf32, #tpu.memory_space<vmem>>, vector<1x2x128xf32>,
    return
  }
  func.func @transform_0(%arg0: i32) -> (i32, i32, i32, i32) {
    %c0_i32 = arith.constant 0 : i32
    %c0_i32_0 = arith.constant 0 : i32
    %c0_i32_1 = arith.constant 0 : i32
    %c0_i32_2 = arith.constant 0 : i32
    return %c0_i32, %c0_i32_0, %c0_i32_1, %arg0 : i32, i32, i32, i32
  }
  func.func @transform_1(%arg0: i32) -> (i32, i32) {
    %c0_i32 = arith.constant 0 : i32
    %c0_i32_0 = arith.constant 0 : i32
    %c0_i32_1 = arith.constant 0 : i32
    return %c0_i32, %c0_i32_0 : i32, i32
  }
  func.func @transform_2(%arg0: i32) -> i32 {
    %c0_i32 = arith.constant 0 : i32
    %c0_i32_0 = arith.constant 0 : i32
    return %c0_i32 : i32
  }
  func.func @transform_3(%arg0: i32) -> (i32, i32, i32) {
    %c0_i32 = arith.constant 0 : i32
    %c0_i32_0 = arith.constant 0 : i32
    %c0_i32_1 = arith.constant 0 : i32
    return %arg0, %c0_i32, %c0_i32_0 : i32, i32, i32
  }
}

module attributes {stable_mosaic.version = 11 : i64} {
  func.func @kernel(%arg0: i32, %arg1: i32, %arg2: memref<6x8x128xf32, #tpu.memory_space<vmem>>, %arg3: memref<6x8x1xf32, #tpu.memory_space<vmem>>, %arg4: memref<8x128xf32, #tpu.memory_space<vmem>>, %arg5: memref<2x128xf32, #tpu.memory_space<vmem>>) attributes {dimension_semantics = [#tpu.dimension_semantics<parallel>, #tpu.dimension_semantics<parallel>], iteration_bounds = array<i64: 1, 2>, scalar_prefetch = 0 : i64, scratch_operands = 0 : i64, tpu.core_type = #tpu.core_type<tc>, window_params = [{transform_indices = @transform_0, window_bounds = array<i64: 6, 8, 128>}, {transform_indices = @transform_1, window_bounds = array<i64: 6, 8, 1>}, {transform_indices = @transform_2, window_bounds = array<i64: 8, 128>}, {transform_indices = @transform_3, window_bounds = array<i64: 2, 128>}]} {
    %c0 = arith.constant 0 : index
    %c0_0 = arith.constant 0 : index
    %c0_1 = arith.constant 0 : index
    %0 = vector.load %arg3[%c0, %c0_0, %c0_1] : memref<6x8x1xf32, #tpu.memory_space<vmem>>, vector<1x8x1xf32>
    %1 = vector.shape_cast %0 : vector<1x8x1xf32> to vector<8x1xf32>
    %c0_2 = arith.constant 0 : index
    %c0_3 = arith.constant 0 : index
    %c0_4 = arith.constant 0 : index
    %2 = vector.load %arg2[%c0_2, %c0_3, %c0_4] : memref<6x8x128xf32, #tpu.memory_space<vmem>>, vector<1x8x128xf32>
    %3 = vector.shape_cast %2 : vector<1x8x128xf32> to vector<8x128xf32>
    %4 = vector.broadcast %1 : vector<8x1xf32> to vector<8x128xf32>
    %5 = arith.mulf %4, %3 : vector<8x128xf32>
    %c1 = arith.constant 1 : index
    %c0_5 = arith.constant 0 : index
    %c0_6 = arith.constant 0 : index
    %6 = vector.load %arg3[%c1, %c0_5, %c0_6] : memref<6x8x1xf32, #tpu.memory_space<vmem>>, vector<1x8x1xf32>
    %7 = vector.shape_cast %6 : vector<1x8x1xf32> to vector<8x1xf32>
    %c1_7 = arith.constant 1 : index
    %c0_8 = arith.constant 0 : index
    %c0_9 = arith.constant 0 : index
    %8 = vector.load %arg2[%c1_7, %c0_8, %c0_9] : memref<6x8x128xf32, #tpu.memory_space<vmem>>, vector<1x8x128xf32>
    %9 = vector.shape_cast %8 : vector<1x8x128xf32> to vector<8x128xf32>
    %10 = vector.broadcast %7 : vector<8x1xf32> to vector<8x128xf32>
    %11 = arith.mulf %10, %9 : vector<8x128xf32>
    %12 = arith.addf %5, %11 : vector<8x128xf32>
    %c2 = arith.constant 2 : index
    %c0_10 = arith.constant 0 : index
    %c0_11 = arith.constant 0 : index
    %13 = vector.load %arg3[%c2, %c0_10, %c0_11] : memref<6x8x1xf32, #tpu.memory_space<vmem>>, vector<1x8x1xf32>
    %14 = vector.shape_cast %13 : vector<1x8x1xf32> to vector<8x1xf32>
    %c2_12 = arith.constant 2 : index
    %c0_13 = arith.constant 0 : index
    %c0_14 = arith.constant 0 : index
    %15 = vector.load %arg2[%c2_12, %c0_13, %c0_14] : memref<6x8x128xf32, #tpu.memory_space<vmem>>, vector<1x8x128xf32>
    %16 = vector.shape_cast %15 : vector<1x8x128xf32> to vector<8x128xf32>
    %17 = vector.broadcast %14 : vector<8x1xf32> to vector<8x128xf32>
    %18 = arith.mulf %17, %16 : vector<8x128xf32>
    %19 = arith.addf %12, %18 : vector<8x128xf32>
    %c3 = arith.constant 3 : index
    %c0_15 = arith.constant 0 : index
    %c0_16 = arith.constant 0 : index
    %20 = vector.load %arg3[%c3, %c0_15, %c0_16] : memref<6x8x1xf32, #tpu.memory_space<vmem>>, vector<1x8x1xf32>
    %21 = vector.shape_cast %20 : vector<1x8x1xf32> to vector<8x1xf32>
    %c3_17 = arith.constant 3 : index
    %c0_18 = arith.constant 0 : index
    %c0_19 = arith.constant 0 : index
    %22 = vector.load %arg2[%c3_17, %c0_18, %c0_19] : memref<6x8x128xf32, #tpu.memory_space<vmem>>, vector<1x8x128xf32>
    %23 = vector.shape_cast %22 : vector<1x8x128xf32> to vector<8x128xf32>
    %24 = vector.broadcast %21 : vector<8x1xf32> to vector<8x128xf32>
    %25 = arith.mulf %24, %23 : vector<8x128xf32>
    %26 = arith.addf %19, %25 : vector<8x128xf32>
    %c4 = arith.constant 4 : index
    %c0_20 = arith.constant 0 : index
    %c0_21 = arith.constant 0 : index
    %27 = vector.load %arg3[%c4, %c0_20, %c0_21] : memref<6x8x1xf32, #tpu.memory_space<vmem>>, vector<1x8x1xf32>
    %28 = vector.shape_cast %27 : vector<1x8x1xf32> to vector<8x1xf32>
    %c4_22 = arith.constant 4 : index
    %c0_23 = arith.constant 0 : index
    %c0_24 = arith.constant 0 : index
    %29 = vector.load %arg2[%c4_22, %c0_23, %c0_24] : memref<6x8x128xf32, #tpu.memory_space<vmem>>, vector<1x8x128xf32>
    %30 = vector.shape_cast %29 : vector<1x8x128xf32> to vector<8x128xf32>
    %31 = vector.broadcast %28 : vector<8x1xf32> to vector<8x128xf32>
    %32 = arith.mulf %31, %30 : vector<8x128xf32>
    %33 = arith.addf %26, %32 : vector<8x128xf32>
    %c5 = arith.constant 5 : index
    %c0_25 = arith.constant 0 : index
    %c0_26 = arith.constant 0 : index
    %34 = vector.load %arg3[%c5, %c0_25, %c0_26] : memref<6x8x1xf32, #tpu.memory_space<vmem>>, vector<1x8x1xf32>
    %35 = vector.shape_cast %34 : vector<1x8x1xf32> to vector<8x1xf32>
    %c5_27 = arith.constant 5 : index
    %c0_28 = arith.constant 0 : index
    %c0_29 = arith.constant 0 : index
    %36 = vector.load %arg2[%c5_27, %c0_28, %c0_29] : memref<6x8x128xf32, #tpu.memory_space<vmem>>, vector<1x8x128xf32>
    %37 = vector.shape_cast %36 : vector<1x8x128xf32> to vector<8x128xf32>
    %38 = vector.broadcast %35 : vector<8x1xf32> to vector<8x128xf32>
    %39 = arith.mulf %38, %37 : vector<8x128xf32>
    %40 = arith.addf %33, %39 : vector<8x128xf32>
    %c0_30 = arith.constant 0 : index
    %c0_31 = arith.constant 0 : index
    %41 = vector.load %arg4[%c0_30, %c0_31] : memref<8x128xf32, #tpu.memory_space<vmem>>, vector<8x128xf32>
    tpu.vector_store %arg4[%c0_30, %c0_31], %40 {strides = array<i32>} : memref<8x128xf32, #tpu.memory_space<vmem>>, vector<8x128xf32>,
    %c8_i32 = arith.constant 8 : i32
    %42 = arith.muli %arg0, %c8_i32 : i32
    %43 = tpu.iota {dimensions = array<i32: 0>} : vector<8x1xi32>
    %44 = vector.broadcast %42 : i32 to vector<8x1xi32>
    %45 = arith.addi %44, %43 : vector<8x1xi32>
    %c6_i32 = arith.constant 6 : i32
    %46 = vector.broadcast %c6_i32 : i32 to vector<8x1xi32>
    %47 = arith.cmpi slt, %45, %46 : vector<8x1xi32>
    %cst = arith.constant 0x7F800000 : f32
    %48 = vector.shape_cast %47 : vector<8x1xi1> to vector<8x1xi1>
    %49 = vector.broadcast %48 : vector<8x1xi1> to vector<8x128xi1>
    %50 = vector.broadcast %cst : f32 to vector<8x128xf32>
    %51 = arith.select %49, %40, %50 : vector<8x128xi1>, vector<8x128xf32>
    %52 = vector.shape_cast %51 : vector<8x128xf32> to vector<1x8x128xf32>
    %cst_32 = arith.constant dense<0x7F800000> : vector<1xf32>
    %53 = vector.multi_reduction <minimumf>, %52, %cst_32 [1, 2] : vector<1x8x128xf32> to vector<1xf32>
    %54 = vector.shape_cast %53 : vector<1xf32> to vector<1x1x1xf32>
    %55 = vector.extract %54[0, 0, 0] : f32 from vector<1x1x1xf32>
    %cst_33 = arith.constant 0xFF800000 : f32
    %56 = vector.shape_cast %47 : vector<8x1xi1> to vector<8x1xi1>
    %57 = vector.broadcast %56 : vector<8x1xi1> to vector<8x128xi1>
    %58 = vector.broadcast %cst_33 : f32 to vector<8x128xf32>
    %59 = arith.select %57, %40, %58 : vector<8x128xi1>, vector<8x128xf32>
    %60 = vector.shape_cast %59 : vector<8x128xf32> to vector<1x8x128xf32>
    %cst_34 = arith.constant dense<0xFF800000> : vector<1xf32>
    %61 = vector.multi_reduction <maximumf>, %60, %cst_34 [1, 2] : vector<1x8x128xf32> to vector<1xf32>
    %62 = vector.shape_cast %61 : vector<1xf32> to vector<1x1x1xf32>
    %63 = vector.extract %62[0, 0, 0] : f32 from vector<1x1x1xf32>
    %64 = vector.broadcast %55 : f32 to vector<1x128xf32>
    %c0_35 = arith.constant 0 : index
    %c0_36 = arith.constant 0 : index
    %65 = vector.load %arg5[%c0_35, %c0_36] : memref<2x128xf32, #tpu.memory_space<vmem>>, vector<1x128xf32>
    tpu.vector_store %arg5[%c0_35, %c0_36], %64 {strides = array<i32>} : memref<2x128xf32, #tpu.memory_space<vmem>>, vector<1x128xf32>,
    %66 = vector.broadcast %63 : f32 to vector<1x128xf32>
    %c1_37 = arith.constant 1 : index
    %c0_38 = arith.constant 0 : index
    %67 = vector.load %arg5[%c1_37, %c0_38] : memref<2x128xf32, #tpu.memory_space<vmem>>, vector<1x128xf32>
    tpu.vector_store %arg5[%c1_37, %c0_38], %66 {strides = array<i32>} : memref<2x128xf32, #tpu.memory_space<vmem>>, vector<1x128xf32>,
    return
  }
  func.func @transform_0(%arg0: i32, %arg1: i32) -> (i32, i32, i32) {
    %c0_i32 = arith.constant 0 : i32
    %c0_i32_0 = arith.constant 0 : i32
    return %c0_i32, %arg0, %arg1 : i32, i32, i32
  }
  func.func @transform_1(%arg0: i32, %arg1: i32) -> (i32, i32, i32) {
    %c0_i32 = arith.constant 0 : i32
    %c0_i32_0 = arith.constant 0 : i32
    %c0_i32_1 = arith.constant 0 : i32
    return %c0_i32, %arg0, %c0_i32_0 : i32, i32, i32
  }
  func.func @transform_2(%arg0: i32, %arg1: i32) -> (i32, i32) {
    %c0_i32 = arith.constant 0 : i32
    return %arg0, %arg1 : i32, i32
  }
  func.func @transform_3(%arg0: i32, %arg1: i32) -> (i32, i32) {
    %c2_i32 = arith.constant 2 : i32
    %0 = arith.muli %arg0, %c2_i32 : i32
    %1 = arith.addi %0, %arg1 : i32
    %c0_i32 = arith.constant 0 : i32
    %c0_i32_0 = arith.constant 0 : i32
    return %c0_i32, %1 : i32, i32
  }
}

</mosaic_0001>

<llo_original>
// kernel: cse_forward.3
$region0: #{cse_forward.3}
  #allocation0 [shape = 'u32[]', space=smem, size = 0x4, offset = 0x4, fixed_abs, tag = 'smem constant byte address 0x4 - core index']
  #allocation1 [shape = 'u32[144,128]{1,0:T(1,128)}', space=vmem, size = 0x12000, scoped, tag = 'internal scratch']
  %s0 = inlined_call_operand.vmem [shape: f32[6,6,256], index: 0, kind: input, shape index: {}]
  %s1 = inlined_call_operand.vmem [shape: f32[6,6,1], index: 1, kind: input, shape index: {}]
  %s2 = inlined_call_operand.vmem [shape: f32[6,256], index: 2, kind: output, shape index: {0}]
  %s3 = inlined_call_operand.vmem [shape: f32[2,256], index: 3, kind: output, shape index: {1}]
  %4 = xla_tuple %s2, %s3
  %s5 = sld [smem:[#allocation0]]
  $region87: #{cse_forward.3} parent=0
    _
  %s7 = ssub.s32 1, %s5
  %s8 = scalar_select 0, %s7, %s5
  $region1: #{cse_forward.3} parent=0
    #allocation2 [shape = 'u8[49152]{0}', space=vmem, size = 0xc000, scoped, tag = 'input window, operand 0']
    loop: start=0, step=1, limit=4
    $region2: #{cse_forward.3} parent=1 // loop_pre_header
      _
    $region3: #{cse_forward.3} parent=1 // loop_header
      %s10 = sphi 0, %s14
      %p11 = scmp.ge.s32.totalorder %s10, 4
      %s17 = sphi 0, %s29
      %s18 = sphi 0, %s25
      %s19 = sphi 0, %s17
      %s20 = sphi 0, %s18
      %s21 = sphi 0, %s19
      %s22 = sphi 0, %s20
      %s34 = sphi 0, %s36
      %s37 = sphi 0, %s34
      %s38 = sphi 0, %s37
      %s54 = sphi 0, %s38
      %s60 = sphi 0, %s62
      %s63 = sphi 0, %s60
      %s64 = sphi 0, %s63
      %s80 = sphi 0, %s64
      %s88 = sphi 0, %s90
      %s91 = sphi 0, %s88
      %s92 = sphi 0, %s91
      %s108 = sphi 0, %s92
      %s118 = sphi 0, %s120
      %s121 = sphi 0, %s118
      %s122 = sphi 0, %s121
      %s138 = sphi 0, %s122
    $region4: #{cse_forward.3} parent=1 // loop_header_branch
      %13 = sbr.rel (%p11) target = $region8
    $region5: #{cse_forward.3} parent=1 // loop_body
      %s15 = ssub.s32 %s10, 1
      %s16 = ssub.s32 %s10, 2
      %s23 = sadd.s32 1, %s18
      %p24 = scmp.ge.s32.totalorder %s23, 2
      %s25 = scalar_select %p24, 0, %s23
      %s26 = sadd.s32 1, %s17
      %s27 = scalar_select %p24, %s26, %s17
      %p28 = scmp.ge.s32.totalorder %s27, 1
      %s29 = scalar_select %p28, 0, %s27
      %s30 = ssub.s32 %s17, %s29
      %s31 = ssub.s32 %s18, %s25
      %s32 = sor.u32 %s30, %s31
      %p33 = scmp.eq.s32.totalorder %s32, 0
      %s35 = sadd.s32 %s34, 1
      %s36 = scalar_select %p33, %s34, %s35
      %p39 = pneg %p33
      %p40 = scmp.eq.s32.totalorder %s10, 1
      %p41 = por %p39, %p40
      %p42 = scmp.ne.s32.totalorder %s34, %s37
      %p43 = scmp.eq.s32.totalorder %s10, 0
      %p44 = por %p42, %p43
      %p45 = scmp.ne.s32.totalorder %s34, %s37
      %p46 = scmp.eq.s32.totalorder %s15, 1
      %p47 = por %p45, %p46
      %p48 = scmp.ne.s32.totalorder %s37, %s38
      %p49 = scmp.eq.s32.totalorder %s15, 0
      %p50 = por %p48, %p49
      %p51 = scmp.ne.s32.totalorder %s37, %s38
      %p52 = scmp.eq.s32.totalorder %s16, 1
      %p53 = por %p51, %p52
      %p55 = scmp.ne.s32.totalorder %s38, %s54
      %p56 = scmp.eq.s32.totalorder %s16, 0
      %p57 = por %p55, %p56
      %s58 = ssub.s32 %s17, %s29
      %p59 = scmp.eq.s32.totalorder %s58, 0
      %s61 = sadd.s32 %s60, 1
      %s62 = scalar_select %p59, %s60, %s61
      %p65 = pneg %p59
      %p66 = scmp.eq.s32.totalorder %s10, 1
      %p67 = por %p65, %p66
      %p68 = scmp.ne.s32.totalorder %s60, %s63
      %p69 = scmp.eq.s32.totalorder %s10, 0
      %p70 = por %p68, %p69
      %p71 = scmp.ne.s32.totalorder %s60, %s63
      %p72 = scmp.eq.s32.totalorder %s15, 1
      %p73 = por %p71, %p72
      %p74 = scmp.ne.s32.totalorder %s63, %s64
      %p75 = scmp.eq.s32.totalorder %s15, 0
      %p76 = por %p74, %p75
      %p77 = scmp.ne.s32.totalorder %s63, %s64
      %p78 = scmp.eq.s32.totalorder %s16, 1
      %p79 = por %p77, %p78
      %p81 = scmp.ne.s32.totalorder %s64, %s80
      %p82 = scmp.eq.s32.totalorder %s16, 0
      %p83 = por %p81, %p82
      %s84 = ssub.s32 %s17, %s29
      %s85 = ssub.s32 %s18, %s25
      %s86 = sor.u32 %s84, %s85
      %p87 = scmp.eq.s32.totalorder %s86, 0
      %s89 = sadd.s32 %s88, 1
      %s90 = scalar_select %p87, %s88, %s89
      %p93 = pneg %p87
      %p94 = scmp.eq.s32.totalorder %s10, 1
      %p95 = por %p93, %p94
      %p96 = scmp.ne.s32.totalorder %s88, %s91
      %p97 = scmp.eq.s32.totalorder %s10, 0
      %p98 = por %p96, %p97
      %p99 = scmp.ne.s32.totalorder %s88, %s91
      %p100 = scmp.eq.s32.totalorder %s15, 1
      %p101 = por %p99, %p100
      %p102 = scmp.ne.s32.totalorder %s91, %s92
      %p103 = scmp.eq.s32.totalorder %s15, 0
      %p104 = por %p102, %p103
      %p105 = scmp.ne.s32.totalorder %s91, %s92
      %p106 = scmp.eq.s32.totalorder %s16, 1
      %p107 = por %p105, %p106
      %p109 = scmp.ne.s32.totalorder %s92, %s108
      %p110 = scmp.eq.s32.totalorder %s16, 0
      %p111 = por %p109, %p110
      %s112 = smul.u32 %s17, 2
      %s113 = sadd.s32 %s112, %s18
      %s114 = smul.u32 %s29, 2
      %s115 = sadd.s32 %s114, %s25
      %s116 = ssub.s32 %s113, %s115
      %p117 = scmp.eq.s32.totalorder %s116, 0
      %s119 = sadd.s32 %s118, 1
      %s120 = scalar_select %p117, %s118, %s119
      %p123 = pneg %p117
      %p124 = scmp.eq.s32.totalorder %s10, 1
      %p125 = por %p123, %p124
      %p126 = scmp.ne.s32.totalorder %s118, %s121
      %p127 = scmp.eq.s32.totalorder %s10, 0
      %p128 = por %p126, %p127
      %p129 = scmp.ne.s32.totalorder %s118, %s121
      %p130 = scmp.eq.s32.totalorder %s15, 1
      %p131 = por %p129, %p130
      %p132 = scmp.ne.s32.totalorder %s121, %s122
      %p133 = scmp.eq.s32.totalorder %s15, 0
      %p134 = por %p132, %p133
      %p135 = scmp.ne.s32.totalorder %s121, %s122
      %p136 = scmp.eq.s32.totalorder %s16, 1
      %p137 = por %p135, %p136
      %p139 = scmp.ne.s32.totalorder %s122, %s138
      %p140 = scmp.eq.s32.totalorder %s16, 0
      %p141 = por %p139, %p140
      %p142 = scmp.le.s32.totalorder 1, %s10
      %p143 = scmp.lt.s32.totalorder %s10, 3
      %p144 = pnand %p142, %p143
      %p145 = pneg %p144
      // Predicated region
      $region9: #{cse_forward.3} parent=5 // pred_check
        _
      $region10: #{cse_forward.3} parent=5 // pred_check_branch
        %147 = sbr.rel (%p144) target = $region12
      $region11: #{cse_forward.3} parent=5 // pred_region
        %s148 = ssub.s32 %s10, 1
        // Predicated region
        $region13: #{cse_forward.3} parent=11 // pred_check
          %p149 = pneg %p76
        $region14: #{cse_forward.3} parent=11 // pred_check_branch
          %151 = sbr.rel (%p149) target = $region16
        $region15: #{cse_forward.3} parent=11 // pred_region
          %p152 = scmp.lt.s32.totalorder %s19, 0
          %s153 = scalar_select %p152, %s19, 0
          %s154 = smul.addr %s153, 8
          %s155 = scalar_lea.vmem %s1, %s154
        $region16: #{cse_forward.3} parent=11 // pred_fallthru
          _
      $region12: #{cse_forward.3} parent=5 // pred_fallthru
        _
      %p156 = scmp.lt.s32.totalorder %s10, 2
      // Predicated region
      $region17: #{cse_forward.3} parent=5 // pred_check
        %p157 = pneg %p156
      $region18: #{cse_forward.3} parent=5 // pred_check_branch
        %159 = sbr.rel (%p157) target = $region20
      $region19: #{cse_forward.3} parent=5 // pred_region
        // Predicated region
        $region21: #{cse_forward.3} parent=19 // pred_check
          %p160 = pneg %p44
        $region22: #{cse_forward.3} parent=19 // pred_check_branch
          %162 = sbr.rel (%p160) target = $region24
        $region23: #{cse_forward.3} parent=19 // pred_region
          %s163 = sand.u32 %s34, 1
          %s164 = sand.u32 %s34, 1
          %s165 = smul.addr %s164, 48
          %s166 = scalar_lea.vmem [#allocation2], %s165
          %s167 = smul.addr %s17, 2
          %s168 = sadd.s32 %s18, %s167
          %s169 = smul.addr %s168, 8
          %s170 = scalar_lea.vmem %s0, %s169
          // Predicated region
          $region25: #{cse_forward.3} parent=23 // pred_check
            _
          $region26: #{cse_forward.3} parent=23 // pred_check_branch
            %172 = sbr.rel (0) target = $region28
          $region27: #{cse_forward.3} parent=23 // pred_region
            // Predicated region
            $region29: #{cse_forward.3} parent=27 // pred_check
              _
            $region30: #{cse_forward.3} parent=27 // pred_check_branch
              %174 = sbr.rel (0) target = $region32
            $region31: #{cse_forward.3} parent=27 // pred_region
              // Predicated region
              $region44: #{cse_forward.3} parent=31 // pred_check
                _
              $region45: #{cse_forward.3} parent=31 // pred_check_branch
                %200 = sbr.rel (0) target = $region47
              $region46: #{cse_forward.3} parent=31 // pred_region
                loop: start=0, step=1, limit=1
                $region48: #{cse_forward.3} parent=46 // loop_pre_header
                  _
                $region49: #{cse_forward.3} parent=46 // loop_header
                  %s202 = sphi 0, %s206
                  %p203 = scmp.ge.s32.totalorder %s202, 1
                  %s207 = sphi %s170, %s170
                  %s208 = sphi %s166, %s166
                $region50: #{cse_forward.3} parent=46 // loop_header_branch
                  %205 = sbr.rel (%p203) target = $region54
                $region51: #{cse_forward.3} parent=46 // loop_body
                  %v209 = vld [vmem:[%s207] sm:$0xff]
                  %210 = vst [vmem:[%s208] sm:$0xff] %v209
                  %v211 = vld [vmem:[%s207 + $0x10] sm:$0xff]
                  %212 = vst [vmem:[%s208 + $0x8] sm:$0xff] %v211
                  %v213 = vld [vmem:[%s207 + $0x20] sm:$0xff]
                  %214 = vst [vmem:[%s208 + $0x10] sm:$0xff] %v213
                  %v215 = vld [vmem:[%s207 + $0x30] sm:$0xff]
                  %216 = vst [vmem:[%s208 + $0x18] sm:$0xff] %v215
                  %v217 = vld [vmem:[%s207 + $0x40] sm:$0xff]
                  %218 = vst [vmem:[%s208 + $0x20] sm:$0xff] %v217
                  %v219 = vld [vmem:[%s207 + $0x50] sm:$0xff]
                  %220 = vst [vmem:[%s208 + $0x28] sm:$0xff] %v219
                $region52: #{cse_forward.3} parent=46 // loop_footer
                  %s206 = sadd.s32 1, %s202
                $region53: #{cse_forward.3} parent=46 // loop_footer_branch
                  %201 = sbr.rel target = $region49
                $region54: #{cse_forward.3} parent=46 // loop_exit
                  _
              $region47: #{cse_forward.3} parent=31 // pred_fallthru
                _
              // Predicated region
              $region55: #{cse_forward.3} parent=31 // pred_check
                _
              $region56: #{cse_forward.3} parent=31 // pred_check_branch
                %222 = sbr.rel target = $region58
              $region57: #{cse_forward.3} parent=31 // pred_region
                _
              $region58: #{cse_forward.3} parent=31 // pred_fallthru
                _
            $region32: #{cse_forward.3} parent=27 // pred_fallthru
              _
            // Predicated region
            $region33: #{cse_forward.3} parent=27 // pred_check
              _
            $region34: #{cse_forward.3} parent=27 // pred_check_branch
              %176 = sbr.rel target = $region36
            $region35: #{cse_forward.3} parent=27 // pred_region
              %s178 = ssub.s32 256, 1
              loop: start=0, step=1, limit=1
              $region37: #{cse_forward.3} parent=35 // loop_pre_header
                _
              $region38: #{cse_forward.3} parent=35 // loop_header
                %s180 = sphi 0, %s184
                %p181 = scmp.ge.s32.totalorder %s180, 1
                %s185 = sphi %s170, %s170
                %s186 = sphi %s166, %s166
              $region39: #{cse_forward.3} parent=35 // loop_header_branch
                %183 = sbr.rel (%p181) target = $region43
              $region40: #{cse_forward.3} parent=35 // loop_body
                %v187 = vld [vmem:[%s185] sm:%s178]
                %188 = vst [vmem:[%s186] sm:%s178] %v187
                %v189 = vld [vmem:[%s185 + $0x10] sm:%s178]
                %190 = vst [vmem:[%s186 + $0x8] sm:%s178] %v189
                %v191 = vld [vmem:[%s185 + $0x20] sm:%s178]
                %192 = vst [vmem:[%s186 + $0x10] sm:%s178] %v191
                %v193 = vld [vmem:[%s185 + $0x30] sm:%s178]
                %194 = vst [vmem:[%s186 + $0x18] sm:%s178] %v193
                %v195 = vld [vmem:[%s185 + $0x40] sm:%s178]
                %196 = vst [vmem:[%s186 + $0x20] sm:%s178] %v195
                %v197 = vld [vmem:[%s185 + $0x50] sm:%s178]
                %198 = vst [vmem:[%s186 + $0x28] sm:%s178] %v197
              $region41: #{cse_forward.3} parent=35 // loop_footer
                %s184 = sadd.s32 1, %s180
              $region42: #{cse_forward.3} parent=35 // loop_footer_branch
                %179 = sbr.rel target = $region38
              $region43: #{cse_forward.3} parent=35 // loop_exit
                _
            $region36: #{cse_forward.3} parent=27 // pred_fallthru
              _
          $region28: #{cse_forward.3} parent=23 // pred_fallthru
            _
          %223 = vnop
        $region24: #{cse_forward.3} parent=19 // pred_fallthru
          _
      $region20: #{cse_forward.3} parent=5 // pred_fallthru
        _
      %p224 = scmp.le.s32.totalorder 1, %s10
      %p225 = scmp.lt.s32.totalorder %s10, 3
      %p226 = pnand %p224, %p225
      %p227 = pneg %p226
      // Predicated region
      $region59: #{cse_forward.3} parent=5 // pred_check
        _
      $region60: #{cse_forward.3} parent=5 // pred_check_branch
        %229 = sbr.rel (%p226) target = $region62
      $region61: #{cse_forward.3} parent=5 // pred_region
        %s230 = ssub.s32 %s10, 1
        %s231 = sand.u32 %s37, 1
        %s232 = sand.u32 %s37, 1
        %s233 = smul.addr %s232, 48
        %s234 = scalar_lea.vmem [#allocation2], %s233
        // Predicated region
        $region63: #{cse_forward.3} parent=61 // pred_check
          %p235 = pneg %p50
        $region64: #{cse_forward.3} parent=61 // pred_check_branch
          %237 = sbr.rel (%p235) target = $region66
        $region65: #{cse_forward.3} parent=61 // pred_region
          _
        $region66: #{cse_forward.3} parent=61 // pred_fallthru
          _
        %s238 = sand.u32 %s37, 1
        %s239 = sand.u32 %s37, 1
        %s240 = smul.addr %s239, 48
        %s241 = scalar_lea.vmem [#allocation2], %s240
        %p242 = pneg %p50
        %p243 = pneg %p47
        %p244 = scmp.lt.s32.totalorder %s19, 0
        %s245 = scalar_select %p244, %s19, 0
        %s246 = smul.addr %s245, 8
        %s247 = scalar_lea.vmem %s1, %s246
        %p248 = pneg %p76
        %p249 = pneg %p73
        %p250 = pneg %p104
        %p251 = pneg %p101
        %p252 = scmp.lt.s32.totalorder %s19, 0
        %s253 = scalar_select %p252, %s19, 0
        %p254 = scmp.lt.s32.totalorder %s20, 1
        %s255 = scalar_select %p254, %s20, 1
        %s256 = smul.addr %s253, 2
        %s257 = sadd.s32 %s255, %s256
        %s258 = smul.addr %s257, 8
        %s259 = scalar_lea.vmem %s2, %s258
        %p260 = pneg %p134
        %p261 = pneg %p131
        %s262 = smul.u32 %s19, 2
        %s263 = sadd.s32 %s262, %s20
        %p264 = scmp.lt.s32.totalorder %s263, 1
        %s265 = scalar_select %p264, %s263, 1
        %s266 = smul.addr %s265, 2
        %s267 = scalar_lea.vmem %s3, %s266
        %p268 = scmp.lt.s32.totalorder %s19, 0
        %s269 = scalar_select %p268, %s19, 0
        %s270 = smul.addr %s269, 8
        %s271 = scalar_lea.vmem %s1, %s270
        %p272 = scmp.lt.s32.totalorder %s19, 0
        %s273 = scalar_select %p272, %s19, 0
        %p274 = scmp.lt.s32.totalorder %s20, 1
        %s275 = scalar_select %p274, %s20, 1
        %s276 = smul.addr %s273, 2
        %s277 = sadd.s32 %s275, %s276
        %s278 = smul.addr %s277, 8
        %s279 = scalar_lea.vmem %s2, %s278
        %s280 = smul.u32 %s19, 2
        %s281 = sadd.s32 %s280, %s20
        %p282 = scmp.lt.s32.totalorder %s281, 1
        %s283 = scalar_select %p282, %s281, 1
        %s284 = smul.addr %s283, 2
        %s285 = scalar_lea.vmem %s3, %s284
        %s286 = smul.u32 %s19, 2
        %s287 = sadd.s32 %s286, %s20
        %v288 = vld [vmem:[%s271] sm:$0xff]
        %v289 = vld [vmem:[%s234] sm:$0xff]
        %291 = vset.pattern.permute.xlu0 0
        %292 = vperm.xlu0 %291, %v288
        %v293 = vpop.permute.xlu0 %292
        %v295 = vmul.f32 %v293, %v289
        %s296 = scalar_lea.vmem %s271, 8
        %v297 = vld [vmem:[%s296] sm:$0xff]
        %s298 = scalar_lea.vmem %s234, 8 [#allocation2]
        %v299 = vld [vmem:[%s298] sm:$0xff]
        %301 = vset.pattern.permute.xlu0 0
        %302 = vperm.xlu0 %301, %v297
        %v303 = vpop.permute.xlu0 %302
        %v305 = vmul.f32 %v303, %v299
        %v306 = vadd.f32 %v295, %v305
        %s307 = scalar_lea.vmem %s271, 16
        %v308 = vld [vmem:[%s307] sm:$0xff]
        %s309 = scalar_lea.vmem %s234, 16 [#allocation2]
        %v310 = vld [vmem:[%s309] sm:$0xff]
        %312 = vset.pattern.permute.xlu0 0
        %313 = vperm.xlu0 %312, %v308
        %v314 = vpop.permute.xlu0 %313
        %v316 = vmul.f32 %v314, %v310
        %v317 = vadd.f32 %v306, %v316
        %s318 = scalar_lea.vmem %s271, 24
        %v319 = vld [vmem:[%s318] sm:$0xff]
        %s320 = scalar_lea.vmem %s234, 24 [#allocation2]
        %v321 = vld [vmem:[%s320] sm:$0xff]
        %323 = vset.pattern.permute.xlu0 0
        %324 = vperm.xlu0 %323, %v319
        %v325 = vpop.permute.xlu0 %324
        %v327 = vmul.f32 %v325, %v321
        %v328 = vadd.f32 %v317, %v327
        %s329 = scalar_lea.vmem %s271, 32
        %v330 = vld [vmem:[%s329] sm:$0xff]
        %s331 = scalar_lea.vmem %s234, 32 [#allocation2]
        %v332 = vld [vmem:[%s331] sm:$0xff]
        %334 = vset.pattern.permute.xlu0 0
        %335 = vperm.xlu0 %334, %v330
        %v336 = vpop.permute.xlu0 %335
        %v338 = vmul.f32 %v336, %v332
        %v339 = vadd.f32 %v328, %v338
        %s340 = scalar_lea.vmem %s271, 40
        %v341 = vld [vmem:[%s340] sm:$0xff]
        %s342 = scalar_lea.vmem %s234, 40 [#allocation2]
        %v343 = vld [vmem:[%s342] sm:$0xff]
        %345 = vset.pattern.permute.xlu0 0
        %346 = vperm.xlu0 %345, %v341
        %v347 = vpop.permute.xlu0 %346
        %v349 = vmul.f32 %v347, %v343
        %v350 = vadd.f32 %v339, %v349
        %351 = vst [vmem:[%s279] sm:$0xff] %v350
        %s352 = smul.u32 %s19, 8
        %v353 = vlaneseq
        %v354 = vshrl.u32 %v353, 7
        %v355 = vstv %s352
        %v356 = vadd.s32 %v355, %v354
        %vm357 = vcmp.lt.s32.totalorder %v356, 6
        %v358 = vsel %vm357, 1, 0
        %vm359 = vcmp.eq.s32.totalorder %v358, 1
        %v360 = vsel %vm359, %v350, inf
        %361 = vmin.xlane.f32.xlu0 %v360
        %v362 = vpop.xlane.xlu0 %361
        %v363 = vrot.slane %v362, 4
        %v364 = vmin.f32 %v362, %v363
        %v365 = vrot.slane %v364, 2
        %v366 = vmin.f32 %v364, %v365
        %v367 = vrot.slane %v366, 1
        %v368 = vmin.f32 %v366, %v367
        %s369 = vtos %v368
        %v370 = vsel %vm359, %v350, -inf
        %371 = vmax.xlane.f32.xlu0 %v370
        %v372 = vpop.xlane.xlu0 %371
        %v373 = vrot.slane %v372, 4
        %v374 = vmax.f32 %v372, %v373
        %v375 = vrot.slane %v374, 2
        %v376 = vmax.f32 %v374, %v375
        %v377 = vrot.slane %v376, 1
        %v378 = vmax.f32 %v376, %v377
        %s379 = vtos %v378
        %v380 = vstv %s369
        %381 = vst [vmem:[%s285] sm:$0x1] %v380
        %v382 = vstv %s379
        %383 = vst [vmem:[%s285 + $0x1] sm:$0x1] %v382
        %p384 = scmp.lt.s32.totalorder %s19, 0
        %s385 = scalar_select %p384, %s19, 0
        %p386 = scmp.lt.s32.totalorder %s20, 1
        %s387 = scalar_select %p386, %s20, 1
        %s388 = smul.addr %s385, 2
        %s389 = sadd.s32 %s387, %s388
        %s390 = smul.addr %s389, 8
        %s391 = scalar_lea.vmem %s2, %s390
        %s392 = smul.u32 %s19, 2
        %s393 = sadd.s32 %s392, %s20
        %p394 = scmp.lt.s32.totalorder %s393, 1
        %s395 = scalar_select %p394, %s393, 1
        %s396 = smul.addr %s395, 2
        %s397 = scalar_lea.vmem %s3, %s396
        // Predicated region
        $region67: #{cse_forward.3} parent=61 // pred_check
          %p398 = pneg %p101
        $region68: #{cse_forward.3} parent=61 // pred_check_branch
          %400 = sbr.rel (%p398) target = $region70
        $region69: #{cse_forward.3} parent=61 // pred_region
          _
        $region70: #{cse_forward.3} parent=61 // pred_fallthru
          _
        // Predicated region
        $region71: #{cse_forward.3} parent=61 // pred_check
          %p401 = pneg %p131
        $region72: #{cse_forward.3} parent=61 // pred_check_branch
          %403 = sbr.rel (%p401) target = $region74
        $region73: #{cse_forward.3} parent=61 // pred_region
          %s404 = smul.u32 %s19, 2
          %s405 = sadd.s32 %s404, %s20
        $region74: #{cse_forward.3} parent=61 // pred_fallthru
          _
      $region62: #{cse_forward.3} parent=5 // pred_fallthru
        _
      %p406 = scmp.le.s32.totalorder 2, %s10
      // Predicated region
      $region75: #{cse_forward.3} parent=5 // pred_check
        %p407 = pneg %p406
      $region76: #{cse_forward.3} parent=5 // pred_check_branch
        %409 = sbr.rel (%p407) target = $region78
      $region77: #{cse_forward.3} parent=5 // pred_region
        %s410 = ssub.s32 %s10, 2
        // Predicated region
        $region79: #{cse_forward.3} parent=77 // pred_check
          %p411 = pneg %p107
        $region80: #{cse_forward.3} parent=77 // pred_check_branch
          %413 = sbr.rel (%p411) target = $region82
        $region81: #{cse_forward.3} parent=77 // pred_region
          %p414 = scmp.lt.s32.totalorder %s21, 0
          %s415 = scalar_select %p414, %s21, 0
          %p416 = scmp.lt.s32.totalorder %s22, 1
          %s417 = scalar_select %p416, %s22, 1
          %s418 = smul.addr %s415, 2
          %s419 = sadd.s32 %s417, %s418
          %s420 = smul.addr %s419, 8
          %s421 = scalar_lea.vmem %s2, %s420
        $region82: #{cse_forward.3} parent=77 // pred_fallthru
          _
        // Predicated region
        $region83: #{cse_forward.3} parent=77 // pred_check
          %p422 = pneg %p137
        $region84: #{cse_forward.3} parent=77 // pred_check_branch
          %424 = sbr.rel (%p422) target = $region86
        $region85: #{cse_forward.3} parent=77 // pred_region
          %s425 = smul.u32 %s21, 2
          %s426 = sadd.s32 %s425, %s22
          %p427 = scmp.lt.s32.totalorder %s426, 1
          %s428 = scalar_select %p427, %s426, 1
          %s429 = smul.addr %s428, 2
          %s430 = scalar_lea.vmem %s3, %s429
        $region86: #{cse_forward.3} parent=77 // pred_fallthru
          _
      $region78: #{cse_forward.3} parent=5 // pred_fallthru
        _
    $region6: #{cse_forward.3} parent=1 // loop_footer
      %s14 = sadd.s32 1, %s10
    $region7: #{cse_forward.3} parent=1 // loop_footer_branch
      %9 = sbr.rel target = $region3
    $region8: #{cse_forward.3} parent=1 // loop_exit
      _

// kernel: cse_forward.2
$region0: #{cse_forward.2}
  #allocation0 [shape = 'u32[]', space=smem, size = 0x4, offset = 0x4, fixed_abs, tag = 'smem constant byte address 0x4 - core index']
  #allocation1 [shape = 'u32[144,128]{1,0:T(1,128)}', space=vmem, size = 0x12000, scoped, tag = 'internal scratch']
  %s0 = inlined_call_operand.vmem [shape: f32[6,2,3,256], index: 0, kind: input, shape index: {}]
  %s1 = inlined_call_operand.vmem [shape: f32[6,3], index: 1, kind: input, shape index: {}]
  %s2 = inlined_call_operand.vmem [shape: f32[6], index: 2, kind: input, shape index: {}]
  %s3 = inlined_call_operand.vmem [shape: f32[2,12,128], index: 3, kind: output, shape index: {}]
  %s4 = sld [smem:[#allocation0]]
  $region94: #{cse_forward.2} parent=0
    _
  %s6 = ssub.s32 1, %s4
  %s7 = scalar_select 0, %s6, %s4
  $region1: #{cse_forward.2} parent=0
    #allocation2 [shape = 'u8[49152]{0}', space=vmem, size = 0xc000, scoped, tag = 'input window, operand 0']
    #allocation3 [shape = 'u8[4096]{0}', space=smem, size = 0x1000, scoped, tag = 'input window, operand 1, single buffered']
    #allocation4 [shape = 's32[2]{0}', space=sflag, size = 0x8, scoped, tag = 'scoped memory for cse_forward.2']
    #allocation5 [shape = 'u8[512]{0}', space=smem, size = 0x200, scoped, tag = 'input window, operand 2, single buffered']
    #allocation6 [shape = 's32[1]{0}', space=sflag, size = 0x4, scoped, tag = 'scoped memory for cse_forward.2']
    %8 = vsyncpa [#allocation4], 0
    %9 = vsyncpa [#allocation6], 0
    loop: start=0, step=1, limit=4
    $region2: #{cse_forward.2} parent=1 // loop_pre_header
      _
    $region3: #{cse_forward.2} parent=1 // loop_header
      %s11 = sphi 0, %s15
      %p12 = scmp.ge.s32.totalorder %s11, 4
      %s21 = sphi 0, %s23
      %s24 = sphi 0, %s21
      %s25 = sphi 0, %s24
      %s41 = sphi 0, %s25
      %s45 = sphi 0, %s45
      %s47 = sphi 0, %s45
      %s48 = sphi 0, %s47
      %s62 = sphi 0, %s48
      %s66 = sphi 0, %s66
      %s68 = sphi 0, %s66
      %s69 = sphi 0, %s68
      %s83 = sphi 0, %s69
      %s89 = sphi 0, %s91
      %s92 = sphi 0, %s89
      %s93 = sphi 0, %s92
      %s109 = sphi 0, %s93
    $region4: #{cse_forward.2} parent=1 // loop_header_branch
      %14 = sbr.rel (%p12) target = $region8
    $region5: #{cse_forward.2} parent=1 // loop_body
      %s16 = ssub.s32 %s11, 1
      %s17 = ssub.s32 %s11, 2
      %s18 = sadd.s32 %s11, 1
      %s19 = ssub.s32 %s11, %s18
      %p20 = scmp.eq.s32.totalorder %s19, 0
      %s22 = sadd.s32 %s21, 1
      %s23 = scalar_select %p20, %s21, %s22
      %p26 = pneg %p20
      %p27 = scmp.eq.s32.totalorder %s11, 1
      %p28 = por %p26, %p27
      %p29 = scmp.ne.s32.totalorder %s21, %s24
      %p30 = scmp.eq.s32.totalorder %s11, 0
      %p31 = por %p29, %p30
      %p32 = scmp.ne.s32.totalorder %s21, %s24
      %p33 = scmp.eq.s32.totalorder %s16, 1
      %p34 = por %p32, %p33
      %p35 = scmp.ne.s32.totalorder %s24, %s25
      %p36 = scmp.eq.s32.totalorder %s16, 0
      %p37 = por %p35, %p36
      %p38 = scmp.ne.s32.totalorder %s24, %s25
      %p39 = scmp.eq.s32.totalorder %s17, 1
      %p40 = por %p38, %p39
      %p42 = scmp.ne.s32.totalorder %s25, %s41
      %p43 = scmp.eq.s32.totalorder %s17, 0
      %p44 = por %p42, %p43
      %s46 = sadd.s32 %s45, 1
      %p49 = scmp.eq.s32.totalorder %s11, 1
      %p50 = scmp.ne.s32.totalorder %s45, %s47
      %p51 = scmp.eq.s32.totalorder %s11, 0
      %p52 = por %p50, %p51
      %p53 = scmp.ne.s32.totalorder %s45, %s47
      %p54 = scmp.eq.s32.totalorder %s16, 1
      %p55 = por %p53, %p54
      %p56 = scmp.ne.s32.totalorder %s47, %s48
      %p57 = scmp.eq.s32.totalorder %s16, 0
      %p58 = por %p56, %p57
      %p59 = scmp.ne.s32.totalorder %s47, %s48
      %p60 = scmp.eq.s32.totalorder %s17, 1
      %p61 = por %p59, %p60
      %p63 = scmp.ne.s32.totalorder %s48, %s62
      %p64 = scmp.eq.s32.totalorder %s17, 0
      %p65 = por %p63, %p64
      %s67 = sadd.s32 %s66, 1
      %p70 = scmp.eq.s32.totalorder %s11, 1
      %p71 = scmp.ne.s32.totalorder %s66, %s68
      %p72 = scmp.eq.s32.totalorder %s11, 0
      %p73 = por %p71, %p72
      %p74 = scmp.ne.s32.totalorder %s66, %s68
      %p75 = scmp.eq.s32.totalorder %s16, 1
      %p76 = por %p74, %p75
      %p77 = scmp.ne.s32.totalorder %s68, %s69
      %p78 = scmp.eq.s32.totalorder %s16, 0
      %p79 = por %p77, %p78
      %p80 = scmp.ne.s32.totalorder %s68, %s69
      %p81 = scmp.eq.s32.totalorder %s17, 1
      %p82 = por %p80, %p81
      %p84 = scmp.ne.s32.totalorder %s69, %s83
      %p85 = scmp.eq.s32.totalorder %s17, 0
      %p86 = por %p84, %p85
      %s87 = ssub.s32 %s11, %s18
      %p88 = scmp.eq.s32.totalorder %s87, 0
      %s90 = sadd.s32 %s89, 1
      %s91 = scalar_select %p88, %s89, %s90
      %p94 = pneg %p88
      %p95 = scmp.eq.s32.totalorder %s11, 1
      %p96 = por %p94, %p95
      %p97 = scmp.ne.s32.totalorder %s89, %s92
      %p98 = scmp.eq.s32.totalorder %s11, 0
      %p99 = por %p97, %p98
      %p100 = scmp.ne.s32.totalorder %s89, %s92
      %p101 = scmp.eq.s32.totalorder %s16, 1
      %p102 = por %p100, %p101
      %p103 = scmp.ne.s32.totalorder %s92, %s93
      %p104 = scmp.eq.s32.totalorder %s16, 0
      %p105 = por %p103, %p104
      %p106 = scmp.ne.s32.totalorder %s92, %s93
      %p107 = scmp.eq.s32.totalorder %s17, 1
      %p108 = por %p106, %p107
      %p110 = scmp.ne.s32.totalorder %s93, %s109
      %p111 = scmp.eq.s32.totalorder %s17, 0
      %p112 = por %p110, %p111
      %p113 = scmp.le.s32.totalorder 1, %s11
      %p114 = scmp.lt.s32.totalorder %s11, 3
      %p115 = pnand %p113, %p114
      %p116 = pneg %p115
      // Predicated region
      $region9: #{cse_forward.2} parent=5 // pred_check
        _
      $region10: #{cse_forward.2} parent=5 // pred_check_branch
        %118 = sbr.rel (%p115) target = $region12
      $region11: #{cse_forward.2} parent=5 // pred_region
        %s119 = ssub.s32 %s11, 1
        // Predicated region
        $region13: #{cse_forward.2} parent=11 // pred_check
          %p120 = pneg %p58
        $region14: #{cse_forward.2} parent=11 // pred_check_branch
          %122 = sbr.rel (%p120) target = $region16
        $region15: #{cse_forward.2} parent=11 // pred_region
          %s124 = ssub.s32 128, 128
          %125 = vsyncadd [#allocation4], %s124
          %s127 = sshll.u32 %s1, 4
          %s128 = int_to_ptr.vmem [resolvable:$true] %s127
          %130 = dma.vmem_to_smem %s128, 128, [#allocation3], [#allocation4]
        $region16: #{cse_forward.2} parent=11 // pred_fallthru
          _
        // Predicated region
        $region17: #{cse_forward.2} parent=11 // pred_check
          %p131 = pneg %p79
        $region18: #{cse_forward.2} parent=11 // pred_check_branch
          %133 = sbr.rel (%p131) target = $region20
        $region19: #{cse_forward.2} parent=11 // pred_region
          %s135 = ssub.s32 16, 16
          %136 = vsyncadd [#allocation6], %s135
          %s138 = sshll.u32 %s2, 4
          %s139 = int_to_ptr.vmem [resolvable:$true] %s138
          %141 = dma.vmem_to_smem %s139, 16, [#allocation5], [#allocation6]
        $region20: #{cse_forward.2} parent=11 // pred_fallthru
          _
      $region12: #{cse_forward.2} parent=5 // pred_fallthru
        _
      %p142 = scmp.lt.s32.totalorder %s11, 2
      // Predicated region
      $region21: #{cse_forward.2} parent=5 // pred_check
        %p143 = pneg %p142
      $region22: #{cse_forward.2} parent=5 // pred_check_branch
        %145 = sbr.rel (%p143) target = $region24
      $region23: #{cse_forward.2} parent=5 // pred_region
        // Predicated region
        $region25: #{cse_forward.2} parent=23 // pred_check
          %p146 = pneg %p31
        $region26: #{cse_forward.2} parent=23 // pred_check_branch
          %148 = sbr.rel (%p146) target = $region28
        $region27: #{cse_forward.2} parent=23 // pred_region
          %s149 = sand.u32 %s21, 1
          %s150 = sand.u32 %s21, 1
          %s151 = smul.addr %s150, 48
          %s152 = scalar_lea.vmem [#allocation2], %s151
          %s153 = smul.addr %s11, 4
          %s154 = scalar_lea.vmem %s0, %s153
          // Predicated region
          $region29: #{cse_forward.2} parent=27 // pred_check
            _
          $region30: #{cse_forward.2} parent=27 // pred_check_branch
            %156 = sbr.rel (0) target = $region32
          $region31: #{cse_forward.2} parent=27 // pred_region
            // Predicated region
            $region33: #{cse_forward.2} parent=31 // pred_check
              _
            $region34: #{cse_forward.2} parent=31 // pred_check_branch
              %158 = sbr.rel target = $region36
            $region35: #{cse_forward.2} parent=31 // pred_region
              // Predicated region
              $region48: #{cse_forward.2} parent=35 // pred_check
                _
              $region49: #{cse_forward.2} parent=35 // pred_check_branch
                %196 = sbr.rel (0) target = $region51
              $region50: #{cse_forward.2} parent=35 // pred_region
                loop: start=0, step=1, limit=1
                $region52: #{cse_forward.2} parent=50 // loop_pre_header
                  _
                $region53: #{cse_forward.2} parent=50 // loop_header
                  %s198 = sphi 0, %s202
                  %p199 = scmp.ge.s32.totalorder %s198, 1
                  %s203 = sphi %s154, %s154
                  %s204 = sphi %s152, %s152
                $region54: #{cse_forward.2} parent=50 // loop_header_branch
                  %201 = sbr.rel (%p199) target = $region58
                $region55: #{cse_forward.2} parent=50 // loop_body
                  _
                $region56: #{cse_forward.2} parent=50 // loop_footer
                  %s202 = sadd.s32 1, %s198
                $region57: #{cse_forward.2} parent=50 // loop_footer_branch
                  %197 = sbr.rel target = $region53
                $region58: #{cse_forward.2} parent=50 // loop_exit
                  _
                %s206 = ssub.s32 16, 1
                loop: start=0, step=1, limit=1
                $region59: #{cse_forward.2} parent=50 // loop_pre_header
                  _
                $region60: #{cse_forward.2} parent=50 // loop_header
                  %s208 = sphi 0, %s212
                  %p209 = scmp.ge.s32.totalorder %s208, 1
                  %s213 = sphi %s154, %s154
                  %s214 = sphi %s152, %s152
                $region61: #{cse_forward.2} parent=50 // loop_header_branch
                  %211 = sbr.rel (%p209) target = $region65
                $region62: #{cse_forward.2} parent=50 // loop_body
                  %v215 = vld [vmem:[%s213] sm:%s206]
                  %216 = vst [vmem:[%s214] sm:%s206] %v215
                  %v217 = vld [vmem:[%s213 + $0x8] sm:%s206]
                  %218 = vst [vmem:[%s214 + $0x4] sm:%s206] %v217
                  %v219 = vld [vmem:[%s213 + $0x10] sm:%s206]
                  %220 = vst [vmem:[%s214 + $0x8] sm:%s206] %v219
                  %v221 = vld [vmem:[%s213 + $0x18] sm:%s206]
                  %222 = vst [vmem:[%s214 + $0xc] sm:%s206] %v221
                  %v223 = vld [vmem:[%s213 + $0x20] sm:%s206]
                  %224 = vst [vmem:[%s214 + $0x10] sm:%s206] %v223
                  %v225 = vld [vmem:[%s213 + $0x28] sm:%s206]
                  %226 = vst [vmem:[%s214 + $0x14] sm:%s206] %v225
                  %v227 = vld [vmem:[%s213 + $0x30] sm:%s206]
                  %228 = vst [vmem:[%s214 + $0x18] sm:%s206] %v227
                  %v229 = vld [vmem:[%s213 + $0x38] sm:%s206]
                  %230 = vst [vmem:[%s214 + $0x1c] sm:%s206] %v229
                  %v231 = vld [vmem:[%s213 + $0x40] sm:%s206]
                  %232 = vst [vmem:[%s214 + $0x20] sm:%s206] %v231
                  %v233 = vld [vmem:[%s213 + $0x48] sm:%s206]
                  %234 = vst [vmem:[%s214 + $0x24] sm:%s206] %v233
                  %v235 = vld [vmem:[%s213 + $0x50] sm:%s206]
                  %236 = vst [vmem:[%s214 + $0x28] sm:%s206] %v235
                  %v237 = vld [vmem:[%s213 + $0x58] sm:%s206]
                  %238 = vst [vmem:[%s214 + $0x2c] sm:%s206] %v237
                $region63: #{cse_forward.2} parent=50 // loop_footer
                  %s212 = sadd.s32 1, %s208
                $region64: #{cse_forward.2} parent=50 // loop_footer_branch
                  %207 = sbr.rel target = $region60
                $region65: #{cse_forward.2} parent=50 // loop_exit
                  _
              $region51: #{cse_forward.2} parent=35 // pred_fallthru
                _
            $region36: #{cse_forward.2} parent=31 // pred_fallthru
              _
            // Predicated region
            $region37: #{cse_forward.2} parent=31 // pred_check
              _
            $region38: #{cse_forward.2} parent=31 // pred_check_branch
              %160 = sbr.rel (0) target = $region40
            $region39: #{cse_forward.2} parent=31 // pred_region
              %s162 = ssub.s32 16, 1
              loop: start=0, step=1, limit=1
              $region41: #{cse_forward.2} parent=39 // loop_pre_header
                _
              $region42: #{cse_forward.2} parent=39 // loop_header
                %s164 = sphi 0, %s168
                %p165 = scmp.ge.s32.totalorder %s164, 1
                %s169 = sphi %s154, %s154
                %s170 = sphi %s152, %s152
              $region43: #{cse_forward.2} parent=39 // loop_header_branch
                %167 = sbr.rel (%p165) target = $region47
              $region44: #{cse_forward.2} parent=39 // loop_body
                %v171 = vld [vmem:[%s169] sm:%s162]
                %172 = vst [vmem:[%s170] sm:%s162] %v171
                %v173 = vld [vmem:[%s169 + $0x8] sm:%s162]
                %174 = vst [vmem:[%s170 + $0x4] sm:%s162] %v173
                %v175 = vld [vmem:[%s169 + $0x10] sm:%s162]
                %176 = vst [vmem:[%s170 + $0x8] sm:%s162] %v175
                %v177 = vld [vmem:[%s169 + $0x18] sm:%s162]
                %178 = vst [vmem:[%s170 + $0xc] sm:%s162] %v177
                %v179 = vld [vmem:[%s169 + $0x20] sm:%s162]
                %180 = vst [vmem:[%s170 + $0x10] sm:%s162] %v179
                %v181 = vld [vmem:[%s169 + $0x28] sm:%s162]
                %182 = vst [vmem:[%s170 + $0x14] sm:%s162] %v181
                %v183 = vld [vmem:[%s169 + $0x30] sm:%s162]
                %184 = vst [vmem:[%s170 + $0x18] sm:%s162] %v183
                %v185 = vld [vmem:[%s169 + $0x38] sm:%s162]
                %186 = vst [vmem:[%s170 + $0x1c] sm:%s162] %v185
                %v187 = vld [vmem:[%s169 + $0x40] sm:%s162]
                %188 = vst [vmem:[%s170 + $0x20] sm:%s162] %v187
                %v189 = vld [vmem:[%s169 + $0x48] sm:%s162]
                %190 = vst [vmem:[%s170 + $0x24] sm:%s162] %v189
                %v191 = vld [vmem:[%s169 + $0x50] sm:%s162]
                %192 = vst [vmem:[%s170 + $0x28] sm:%s162] %v191
                %v193 = vld [vmem:[%s169 + $0x58] sm:%s162]
                %194 = vst [vmem:[%s170 + $0x2c] sm:%s162] %v193
              $region45: #{cse_forward.2} parent=39 // loop_footer
                %s168 = sadd.s32 1, %s164
              $region46: #{cse_forward.2} parent=39 // loop_footer_branch
                %163 = sbr.rel target = $region42
              $region47: #{cse_forward.2} parent=39 // loop_exit
                _
            $region40: #{cse_forward.2} parent=31 // pred_fallthru
              _
          $region32: #{cse_forward.2} parent=27 // pred_fallthru
            _
          %239 = vnop
        $region28: #{cse_forward.2} parent=23 // pred_fallthru
          _
      $region24: #{cse_forward.2} parent=5 // pred_fallthru
        _
      %p240 = scmp.le.s32.totalorder 1, %s11
      %p241 = scmp.lt.s32.totalorder %s11, 3
      %p242 = pnand %p240, %p241
      %p243 = pneg %p242
      // Predicated region
      $region66: #{cse_forward.2} parent=5 // pred_check
        _
      $region67: #{cse_forward.2} parent=5 // pred_check_branch
        %245 = sbr.rel (%p242) target = $region69
      $region68: #{cse_forward.2} parent=5 // pred_region
        %s246 = ssub.s32 %s11, 1
        %s247 = sand.u32 %s24, 1
        %s248 = sand.u32 %s24, 1
        %s249 = smul.addr %s248, 48
        %s250 = scalar_lea.vmem [#allocation2], %s249
        // Predicated region
        $region70: #{cse_forward.2} parent=68 // pred_check
          %p251 = pneg %p37
        $region71: #{cse_forward.2} parent=68 // pred_check_branch
          %253 = sbr.rel (%p251) target = $region73
        $region72: #{cse_forward.2} parent=68 // pred_region
          _
        $region73: #{cse_forward.2} parent=68 // pred_fallthru
          _
        // Predicated region
        $region74: #{cse_forward.2} parent=68 // pred_check
          %p254 = pneg %p58
        $region75: #{cse_forward.2} parent=68 // pred_check_branch
          %256 = sbr.rel (%p254) target = $region77
        $region76: #{cse_forward.2} parent=68 // pred_region
          %257 = dma.done [#allocation4], 128
        $region77: #{cse_forward.2} parent=68 // pred_fallthru
          _
        // Predicated region
        $region78: #{cse_forward.2} parent=68 // pred_check
          %p258 = pneg %p79
        $region79: #{cse_forward.2} parent=68 // pred_check_branch
          %260 = sbr.rel (%p258) target = $region81
        $region80: #{cse_forward.2} parent=68 // pred_region
          %261 = dma.done [#allocation6], 16
        $region81: #{cse_forward.2} parent=68 // pred_fallthru
          _
        %262 = sfence
        %s263 = sand.u32 %s24, 1
        %s264 = sand.u32 %s24, 1
        %s265 = smul.addr %s264, 48
        %s266 = scalar_lea.vmem [#allocation2], %s265
        %p267 = pneg %p37
        %p268 = pneg %p34
        %p269 = pneg %p58
        %p270 = pneg %p55
        %p271 = pneg %p79
        %p272 = pneg %p76
        %p273 = pneg %p105
        %p274 = pneg %p102
        %p275 = scmp.lt.s32.totalorder %s16, 1
        %s276 = scalar_select %p275, %s16, 1
        %s277 = smul.addr %s276, 2
        %s278 = smul.addr %s277, 8
        %s279 = scalar_lea.vmem %s3, %s278
        %p280 = scmp.lt.s32.totalorder %s16, 1
        %s281 = scalar_select %p280, %s16, 1
        %s282 = smul.addr %s281, 2
        %s283 = smul.addr %s282, 8
        %s284 = scalar_lea.vmem %s3, %s283
        %v285 = vld [vmem:[%s250] sm:$0x1]
        %v286 = vld [vmem:[%s250 + $0x4] sm:$0x1]
        %v287 = vld [vmem:[%s250 + $0x1] sm:$0x1]
        %v288 = vld [vmem:[%s250 + $0x5] sm:$0x1]
        %v289 = vld [vmem:[%s250 + $0x2] sm:$0x1]
        %v290 = vld [vmem:[%s250 + $0x6] sm:$0x1]
        %s291 = sld [smem:[#allocation3]]
        %v292 = vstv %s291
        %v293 = vmul.f32 %v292, %v285
        %v294 = vmul.f32 %v292, %v286
        %s295 = sld [smem:[#allocation3 + $0x1]]
        %v296 = vstv %s295
        %v297 = vmul.f32 %v296, %v287
        %v298 = vmul.f32 %v296, %v288
        %v299 = vadd.f32 %v293, %v297
        %v300 = vadd.f32 %v294, %v298
        %s301 = sld [smem:[#allocation3 + $0x2]]
        %v302 = vstv %s301
        %v303 = vmul.f32 %v302, %v289
        %v304 = vmul.f32 %v302, %v290
        %v305 = vadd.f32 %v299, %v303
        %v306 = vadd.f32 %v300, %v304
        %s307 = sld [smem:[#allocation5]]
        %v308 = vstv %s307
        %v309 = vadd.f32 %v305, %v308
        %v310 = vadd.f32 %v306, %v308
        %v311 = vmul.f32 %v309, 0.1
        %v312 = vmul.f32 %v310, 0.1
        %v313 = vmax.f32 %v309, %v311
        %v314 = vmax.f32 %v310, %v312
        %v317 = vrot.slane %v314, 7
        %vm318 = vcmask 1041409
        %v319 = vsel %vm318, %v317, %v313
        %vm321 = vcmask 1041408
        %v322 = vsel %vm321, %v319, 0.0
        %323 = vadd.xlane.f32.xlu0 %v322
        %v324 = vpop.xlane.xlu0 %323
        %325 = vst [vmem:[%s284] sm:$0x3] %v324
        %s326 = scalar_lea.vmem %s250, 8 [#allocation2]
        %v327 = vld [vmem:[%s326] sm:$0x1]
        %v328 = vld [vmem:[%s326 + $0x4] sm:$0x1]
        %v329 = vld [vmem:[%s326 + $0x1] sm:$0x1]
        %v330 = vld [vmem:[%s326 + $0x5] sm:$0x1]
        %v331 = vld [vmem:[%s326 + $0x2] sm:$0x1]
        %v332 = vld [vmem:[%s326 + $0x6] sm:$0x1]
        %s333 = sld [smem:[#allocation3 + $0x80]]
        %v334 = vstv %s333
        %v335 = vmul.f32 %v334, %v327
        %v336 = vmul.f32 %v334, %v328
        %s337 = sld [smem:[#allocation3 + $0x81]]
        %v338 = vstv %s337
        %v339 = vmul.f32 %v338, %v329
        %v340 = vmul.f32 %v338, %v330
        %v341 = vadd.f32 %v335, %v339
        %v342 = vadd.f32 %v336, %v340
        %s343 = sld [smem:[#allocation3 + $0x82]]
        %v344 = vstv %s343
        %v345 = vmul.f32 %v344, %v331
        %v346 = vmul.f32 %v344, %v332
        %v347 = vadd.f32 %v341, %v345
        %v348 = vadd.f32 %v342, %v346
        %s349 = sld [smem:[#allocation5 + $0x1]]
        %v350 = vstv %s349
        %v351 = vadd.f32 %v347, %v350
        %v352 = vadd.f32 %v348, %v350
        %v353 = vmul.f32 %v351, 0.1
        %v354 = vmul.f32 %v352, 0.1
        %v355 = vmax.f32 %v351, %v353
        %v356 = vmax.f32 %v352, %v354
        %v359 = vrot.slane %v356, 7
        %v360 = vsel %vm318, %v359, %v355
        %v362 = vsel %vm321, %v360, 0.0
        %363 = vadd.xlane.f32.xlu0 %v362
        %v364 = vpop.xlane.xlu0 %363
        %365 = vst [vmem:[%s284 + $0x2] sm:$0x3] %v364
        %s366 = scalar_lea.vmem %s250, 16 [#allocation2]
        %v367 = vld [vmem:[%s366] sm:$0x1]
        %v368 = vld [vmem:[%s366 + $0x4] sm:$0x1]
        %v369 = vld [vmem:[%s366 + $0x1] sm:$0x1]
        %v370 = vld [vmem:[%s366 + $0x5] sm:$0x1]
        %v371 = vld [vmem:[%s366 + $0x2] sm:$0x1]
        %v372 = vld [vmem:[%s366 + $0x6] sm:$0x1]
        %s373 = sld [smem:[#allocation3 + $0x100]]
        %v374 = vstv %s373
        %v375 = vmul.f32 %v374, %v367
        %v376 = vmul.f32 %v374, %v368
        %s377 = sld [smem:[#allocation3 + $0x101]]
        %v378 = vstv %s377
        %v379 = vmul.f32 %v378, %v369
        %v380 = vmul.f32 %v378, %v370
        %v381 = vadd.f32 %v375, %v379
        %v382 = vadd.f32 %v376, %v380
        %s383 = sld [smem:[#allocation3 + $0x102]]
        %v384 = vstv %s383
        %v385 = vmul.f32 %v384, %v371
        %v386 = vmul.f32 %v384, %v372
        %v387 = vadd.f32 %v381, %v385
        %v388 = vadd.f32 %v382, %v386
        %s389 = sld [smem:[#allocation5 + $0x2]]
        %v390 = vstv %s389
        %v391 = vadd.f32 %v387, %v390
        %v392 = vadd.f32 %v388, %v390
        %v393 = vmul.f32 %v391, 0.1
        %v394 = vmul.f32 %v392, 0.1
        %v395 = vmax.f32 %v391, %v393
        %v396 = vmax.f32 %v392, %v394
        %v399 = vrot.slane %v396, 7
        %v400 = vsel %vm318, %v399, %v395
        %v402 = vsel %vm321, %v400, 0.0
        %403 = vadd.xlane.f32.xlu0 %v402
        %v404 = vpop.xlane.xlu0 %403
        %405 = vst [vmem:[%s284 + $0x4] sm:$0x3] %v404
        %s406 = scalar_lea.vmem %s250, 24 [#allocation2]
        %v407 = vld [vmem:[%s406] sm:$0x1]
        %v408 = vld [vmem:[%s406 + $0x4] sm:$0x1]
        %v409 = vld [vmem:[%s406 + $0x1] sm:$0x1]
        %v410 = vld [vmem:[%s406 + $0x5] sm:$0x1]
        %v411 = vld [vmem:[%s406 + $0x2] sm:$0x1]
        %v412 = vld [vmem:[%s406 + $0x6] sm:$0x1]
        %s413 = sld [smem:[#allocation3 + $0x180]]
        %v414 = vstv %s413
        %v415 = vmul.f32 %v414, %v407
        %v416 = vmul.f32 %v414, %v408
        %s417 = sld [smem:[#allocation3 + $0x181]]
        %v418 = vstv %s417
        %v419 = vmul.f32 %v418, %v409
        %v420 = vmul.f32 %v418, %v410
        %v421 = vadd.f32 %v415, %v419
        %v422 = vadd.f32 %v416, %v420
        %s423 = sld [smem:[#allocation3 + $0x182]]
        %v424 = vstv %s423
        %v425 = vmul.f32 %v424, %v411
        %v426 = vmul.f32 %v424, %v412
        %v427 = vadd.f32 %v421, %v425
        %v428 = vadd.f32 %v422, %v426
        %s429 = sld [smem:[#allocation5 + $0x3]]
        %v430 = vstv %s429
        %v431 = vadd.f32 %v427, %v430
        %v432 = vadd.f32 %v428, %v430
        %v433 = vmul.f32 %v431, 0.1
        %v434 = vmul.f32 %v432, 0.1
        %v435 = vmax.f32 %v431, %v433
        %v436 = vmax.f32 %v432, %v434
        %v439 = vrot.slane %v436, 7
        %v440 = vsel %vm318, %v439, %v435
        %v442 = vsel %vm321, %v440, 0.0
        %443 = vadd.xlane.f32.xlu0 %v442
        %v444 = vpop.xlane.xlu0 %443
        %445 = vst [vmem:[%s284 + $0x6] sm:$0x3] %v444
        %s446 = scalar_lea.vmem %s250, 32 [#allocation2]
        %v447 = vld [vmem:[%s446] sm:$0x1]
        %v448 = vld [vmem:[%s446 + $0x4] sm:$0x1]
        %v449 = vld [vmem:[%s446 + $0x1] sm:$0x1]
        %v450 = vld [vmem:[%s446 + $0x5] sm:$0x1]
        %v451 = vld [vmem:[%s446 + $0x2] sm:$0x1]
        %v452 = vld [vmem:[%s446 + $0x6] sm:$0x1]
        %s453 = sld [smem:[#allocation3 + $0x200]]
        %v454 = vstv %s453
        %v455 = vmul.f32 %v454, %v447
        %v456 = vmul.f32 %v454, %v448
        %s457 = sld [smem:[#allocation3 + $0x201]]
        %v458 = vstv %s457
        %v459 = vmul.f32 %v458, %v449
        %v460 = vmul.f32 %v458, %v450
        %v461 = vadd.f32 %v455, %v459
        %v462 = vadd.f32 %v456, %v460
        %s463 = sld [smem:[#allocation3 + $0x202]]
        %v464 = vstv %s463
        %v465 = vmul.f32 %v464, %v451
        %v466 = vmul.f32 %v464, %v452
        %v467 = vadd.f32 %v461, %v465
        %v468 = vadd.f32 %v462, %v466
        %s469 = sld [smem:[#allocation5 + $0x4]]
        %v470 = vstv %s469
        %v471 = vadd.f32 %v467, %v470
        %v472 = vadd.f32 %v468, %v470
        %v473 = vmul.f32 %v471, 0.1
        %v474 = vmul.f32 %v472, 0.1
        %v475 = vmax.f32 %v471, %v473
        %v476 = vmax.f32 %v472, %v474
        %v479 = vrot.slane %v476, 7
        %v480 = vsel %vm318, %v479, %v475
        %v482 = vsel %vm321, %v480, 0.0
        %483 = vadd.xlane.f32.xlu0 %v482
        %v484 = vpop.xlane.xlu0 %483
        %485 = vst [vmem:[%s284 + $0x8] sm:$0x3] %v484
        %s486 = scalar_lea.vmem %s250, 40 [#allocation2]
        %v487 = vld [vmem:[%s486] sm:$0x1]
        %v488 = vld [vmem:[%s486 + $0x4] sm:$0x1]
        %v489 = vld [vmem:[%s486 + $0x1] sm:$0x1]
        %v490 = vld [vmem:[%s486 + $0x5] sm:$0x1]
        %v491 = vld [vmem:[%s486 + $0x2] sm:$0x1]
        %v492 = vld [vmem:[%s486 + $0x6] sm:$0x1]
        %s493 = sld [smem:[#allocation3 + $0x280]]
        %v494 = vstv %s493
        %v495 = vmul.f32 %v494, %v487
        %v496 = vmul.f32 %v494, %v488
        %s497 = sld [smem:[#allocation3 + $0x281]]
        %v498 = vstv %s497
        %v499 = vmul.f32 %v498, %v489
        %v500 = vmul.f32 %v498, %v490
        %v501 = vadd.f32 %v495, %v499
        %v502 = vadd.f32 %v496, %v500
        %s503 = sld [smem:[#allocation3 + $0x282]]
        %v504 = vstv %s503
        %v505 = vmul.f32 %v504, %v491
        %v506 = vmul.f32 %v504, %v492
        %v507 = vadd.f32 %v501, %v505
        %v508 = vadd.f32 %v502, %v506
        %s509 = sld [smem:[#allocation5 + $0x5]]
        %v510 = vstv %s509
        %v511 = vadd.f32 %v507, %v510
        %v512 = vadd.f32 %v508, %v510
        %v513 = vmul.f32 %v511, 0.1
        %v514 = vmul.f32 %v512, 0.1
        %v515 = vmax.f32 %v511, %v513
        %v516 = vmax.f32 %v512, %v514
        %v519 = vrot.slane %v516, 7
        %v520 = vsel %vm318, %v519, %v515
        %v522 = vsel %vm321, %v520, 0.0
        %523 = vadd.xlane.f32.xlu0 %v522
        %v524 = vpop.xlane.xlu0 %523
        %525 = vst [vmem:[%s284 + $0xa] sm:$0x3] %v524
        %p526 = scmp.lt.s32.totalorder %s16, 1
        %s527 = scalar_select %p526, %s16, 1
        %s528 = smul.addr %s527, 2
        %s529 = smul.addr %s528, 8
        %s530 = scalar_lea.vmem %s3, %s529
        // Predicated region
        $region82: #{cse_forward.2} parent=68 // pred_check
          %p531 = pneg %p102
        $region83: #{cse_forward.2} parent=68 // pred_check_branch
          %533 = sbr.rel (%p531) target = $region85
        $region84: #{cse_forward.2} parent=68 // pred_region
          _
        $region85: #{cse_forward.2} parent=68 // pred_fallthru
          _
      $region69: #{cse_forward.2} parent=5 // pred_fallthru
        _
      %p534 = scmp.le.s32.totalorder 2, %s11
      // Predicated region
      $region86: #{cse_forward.2} parent=5 // pred_check
        %p535 = pneg %p534
      $region87: #{cse_forward.2} parent=5 // pred_check_branch
        %537 = sbr.rel (%p535) target = $region89
      $region88: #{cse_forward.2} parent=5 // pred_region
        %s538 = ssub.s32 %s11, 2
        // Predicated region
        $region90: #{cse_forward.2} parent=88 // pred_check
          %p539 = pneg %p108
        $region91: #{cse_forward.2} parent=88 // pred_check_branch
          %541 = sbr.rel (%p539) target = $region93
        $region92: #{cse_forward.2} parent=88 // pred_region
          %p542 = scmp.lt.s32.totalorder %s17, 1
          %s543 = scalar_select %p542, %s17, 1
          %s544 = smul.addr %s543, 2
          %s545 = smul.addr %s544, 8
          %s546 = scalar_lea.vmem %s3, %s545
        $region93: #{cse_forward.2} parent=88 // pred_fallthru
          _
      $region89: #{cse_forward.2} parent=5 // pred_fallthru
        _
    $region6: #{cse_forward.2} parent=1 // loop_footer
      %s15 = sadd.s32 1, %s11
    $region7: #{cse_forward.2} parent=1 // loop_footer_branch
      %10 = sbr.rel target = $region3
    $region8: #{cse_forward.2} parent=1 // loop_exit
      _
    %547 = vsyncpa [#allocation4], 1
    %s548 = scalar_lea.sflag [#allocation4], 1
    %549 = vsyncpa %s548, 1
    %550 = vsyncpa [#allocation6], 1

</llo_original>
